<compile_context>
chip_gen: v7x
topology: tpu7x:2x2x1
jax: 0.10.0
libtpu: 0.0.40
codegen_flags: <defaults>
</compile_context>

<pallas_src>
import functools

import jax
import jax.numpy as jnp
from jax import lax
from jax.experimental import pallas as pl
from jax.experimental.pallas import tpu as pltpu

EPS = 1e-5          # torch.nn.BatchNorm2d default eps
NEG_SLOPE = 0.1     # LeakyReLU(0.1)


# ----------------------------- Pallas kernel --------------------------------

def _fused_kernel(x_ref, scale_ref, shift_ref, w_ref, bias_ref, *rest,
                  h_dim, w_dim, add_residual, emit_stats):
    """Fused BN(apply) + LeakyReLU + CoordConv3x3 (+ residual) for one image.

    Layout: channels on sublanes, flattened H*W on the lane axis (lane dense).
      x_ref     : (1, C, H*W)    raw (pre-norm) activation
      scale_ref : (C, 1)         gamma * rsqrt(var + eps)
      shift_ref : (C, 1)         beta - mean * scale
      w_ref     : (Cout, 9*C)    conv taps over the real channels,
                                 column index = (ky*3+kx)*C + cin
      bias_ref  : (Cout, H*W)    conv bias + coordinate-channel contribution
      rest      : [res_ref (1, C, H*W)], out_ref (1, Cout, H*W),
                  [stats_ref (1, Cout, 2)]  (per-image sum / sum-of-squares)
    """
    idx = 0
    if add_residual:
        res_ref = rest[idx]
        idx += 1
    o_ref = rest[idx]
    idx += 1
    if emit_stats:
        stats_ref = rest[idx]

    hw = h_dim * w_dim
    pad = w_dim + 1

    # BatchNorm (precomputed per-channel affine) + LeakyReLU(0.1).  VPU work.
    y = x_ref[0] * scale_ref[...] + shift_ref[...]          # (C, HW)
    y = jnp.maximum(y, NEG_SLOPE * y)
    c_in = y.shape[0]

    # In-kernel zero padding in the flattened domain: a guard band of W+1
    # zeros on each side makes every (dy, dx) tap a static lane slice; only
    # the column wrap (dx != 0) needs a mask.
    zpad = jnp.zeros((c_in, pad), y.dtype)
    ypad = jnp.concatenate([zpad, y, zpad], axis=1)         # (C, HW + 2W + 2)

    col = lax.broadcasted_iota(jnp.int32, (1, hw), 1) % w_dim

    # im2col: 9 shifted / masked views stacked along sublanes -> ONE MXU matmul.
    patches = []
    for ky in range(3):
        for kx in range(3):
            dy, dx = ky - 1, kx - 1
            start = pad + dy * w_dim + dx
            tap = ypad[:, start:start + hw]                 # (C, HW)
            if dx < 0:
                tap = jnp.where(col >= -dx, tap, 0.0)
            elif dx > 0:
                tap = jnp.where(col < w_dim - dx, tap, 0.0)
            patches.append(tap)
    patches = jnp.concatenate(patches, axis=0)              # (9*C, HW)

    # TODO(synk): on v6e/v7x, cast w_ref/patches to bf16 (keep f32 accumulate)
    # for MXU rate + halved traffic; kept f32 here for exactness vs reference.
    out = jnp.dot(w_ref[...], patches,
                  preferred_element_type=jnp.float32)       # (Cout, HW)
    out = out + bias_ref[...]
    if add_residual:
        out = out + res_ref[0]
    o_ref[0] = out.astype(o_ref.dtype)

    if emit_stats:
        # Per-image BN partial stats for the NEXT layer, computed on the XLU
        # (free slot while the MXU/VPU dominate) -> next layer's batch stats
        # never re-read h1 from HBM.
        s = jnp.sum(out, axis=1, keepdims=True)             # (Cout, 1)
        ss = jnp.sum(out * out, axis=1, keepdims=True)      # (Cout, 1)
        stats_ref[0] = jnp.concatenate([s, ss], axis=1).astype(stats_ref.dtype)


# ------------------------------ wrappers -------------------------------------

def fused_bn_act_coord_conv(x_flat, gamma, beta, w, b, h_dim, w_dim,
                            residual=None, stats=None, emit_stats=False):
    """CoordConv3x3(LeakyReLU(BN(x))) [+ residual] [, per-image BN stats].

    x_flat: (N, C, H*W);  w: (9, C+2, Cout) with tap = ky*3+kx;  b: (Cout,).
    `stats`: optional (sum_c, sumsq_c) of x over (N, H*W) reusing fused stats
    from the previous layer.  Returns (N, Cout, H*W) [, (sum_c, sumsq_c)].
    """
    n, c, hw = x_flat.shape
    cout = w.shape[2]
    dt = x_flat.dtype

    # --- BatchNorm2d training-mode batch stats.
    if stats is None:
        # First layer: plain-XLA single-pass reduce over the raw input.
        mean = jnp.mean(x_flat, axis=(0, 2))
        mean_sq = jnp.mean(x_flat * x_flat, axis=(0, 2))
    else:
        # Later layer: partial sums were emitted by the previous fused kernel,
        # so no extra HBM pass over the activation is needed here.
        sum_c, sumsq_c = stats
        inv = 1.0 / float(n * hw)
        mean = sum_c * inv
        mean_sq = sumsq_c * inv
    var = mean_sq - mean * mean                       # biased var (torch BN)
    scale = gamma * lax.rsqrt(var + EPS)
    shift = beta - mean * scale

    # --- Real input channels feed the MXU matmul; the 2 coordinate channels
    # are batch independent -> fold them (and the conv bias) into a per-pixel
    # bias computed once here (tiny), so the kernel never sees C+2 channels.
    w_real = w[:, :c, :]                                          # (9, C, Cout)
    wmat = jnp.transpose(w_real, (2, 0, 1)).reshape(cout, 9 * c)  # (Cout, 9C)

    xx = jnp.broadcast_to(jnp.linspace(-1.0, 1.0, h_dim, dtype=dt)[:, None],
                          (h_dim, w_dim))
    yy = jnp.broadcast_to(jnp.linspace(-1.0, 1.0, w_dim, dtype=dt)[None, :],
                          (h_dim, w_dim))
    coords = jnp.stack([xx, yy], axis=-1)[None]                   # (1,H,W,2)
    w_coord = w[:, c:, :].reshape(3, 3, 2, cout)                  # HWIO
    coord_out = lax.conv_general_dilated(
        coords, w_coord, (1, 1), "SAME",
        dimension_numbers=("NHWC", "HWIO", "NHWC"))[0]            # (H,W,Cout)
    bias_full = jnp.transpose(coord_out + b.reshape(1, 1, cout),
                              (2, 0, 1)).reshape(cout, hw)        # (Cout, HW)

    kernel = functools.partial(_fused_kernel, h_dim=h_dim, w_dim=w_dim,
                               add_residual=residual is not None,
                               emit_stats=emit_stats)

    in_specs = [
        pl.BlockSpec((1, c, hw), lambda i: (i, 0, 0)),
        pl.BlockSpec((c, 1), lambda i: (0, 0)),
        pl.BlockSpec((c, 1), lambda i: (0, 0)),
        pl.BlockSpec((cout, 9 * c), lambda i: (0, 0)),
        pl.BlockSpec((cout, hw), lambda i: (0, 0)),
    ]
    args = [x_flat, scale.reshape(c, 1).astype(dt),
            shift.reshape(c, 1).astype(dt), wmat, bias_full]
    if residual is not None:
        rc = residual.shape[1]
        in_specs.append(pl.BlockSpec((1, rc, hw), lambda i: (i, 0, 0)))
        args.append(residual)

    main_shape = jax.ShapeDtypeStruct((n, cout, hw), dt)
    main_spec = pl.BlockSpec((1, cout, hw), lambda i: (i, 0, 0))
    if emit_stats:
        out_shape = (main_shape, jax.ShapeDtypeStruct((n, cout, 2), jnp.float32))
        out_specs = (main_spec, pl.BlockSpec((1, cout, 2), lambda i: (i, 0, 0)))
    else:
        out_shape = main_shape
        out_specs = main_spec

    result = pl.pallas_call(
        kernel,
        out_shape=out_shape,
        grid=(n,),
        in_specs=in_specs,
        out_specs=out_specs,
        compiler_params=pltpu.CompilerParams(
            dimension_semantics=("parallel",),      # batch iters independent
            vmem_limit_bytes=32 * 1024 * 1024,      # explicit VMEM budget
        ),
    )(*args)

    if emit_stats:
        out, per_image = result                              # (N,Cout,HW),(N,Cout,2)
        sum_c = jnp.sum(per_image[..., 0], axis=0)           # (Cout,)
        sumsq_c = jnp.sum(per_image[..., 1], axis=0)         # (Cout,)
        return out, (sum_c, sumsq_c)
    return result


def res_block_forward(x_nchw, p):
    """Res_Block forward (default config: identity shortcut)."""
    n, c, h, w = x_nchw.shape
    x_flat = x_nchw.reshape(n, c, h * w)        # contiguous view, no transpose
    h1, h1_stats = fused_bn_act_coord_conv(
        x_flat, p["bn1_gamma"], p["bn1_beta"], p["w1"], p["b1"], h, w,
        emit_stats=True)
    out = fused_bn_act_coord_conv(
        h1, p["bn2_gamma"], p["bn2_beta"], p["w2"], p["b2"], h, w,
        residual=x_flat, stats=h1_stats)
    # TODO(synk): learnable_shortcut / input_nc != output_nc Coord_Conv
    # shortcut path not implemented; default Res_Block uses identity shortcut.
    return out.reshape(n, out.shape[1], h, w)


# --------------------------- params & reference ------------------------------

def init_params(key, input_nc, hidden_nc=None, output_nc=None, dtype=jnp.float32):
    hidden_nc = hidden_nc or input_nc
    output_nc = output_nc or input_nc
    k = jax.random.split(key, 6)
    cin1, cin2 = input_nc + 2, hidden_nc + 2
    w1 = jax.random.normal(k[0], (9, cin1, hidden_nc), dtype) / jnp.sqrt(9.0 * cin1)
    b1 = 0.05 * jax.random.normal(k[1], (hidden_nc,), dtype)
    w2 = jax.random.normal(k[2], (9, cin2, output_nc), dtype) / jnp.sqrt(9.0 * cin2)
    b2 = 0.05 * jax.random.normal(k[3], (output_nc,), dtype)
    return dict(
        w1=w1, b1=b1, w2=w2, b2=b2,
        bn1_gamma=1.0 + 0.1 * jax.random.normal(k[4], (input_nc,), dtype),
        bn1_beta=0.1 * jax.random.normal(k[5], (input_nc,), dtype),
        bn2_gamma=jnp.ones((hidden_nc,), dtype),
        bn2_beta=jnp.zeros((hidden_nc,), dtype),
    )


def res_block_reference(x_nchw, p):
    """Pure-JAX reference (mirrors PyTorch forward semantics)."""
    x = jnp.transpose(x_nchw, (0, 2, 3, 1))

    def bn_act_ref(h, g, b):
        mean = jnp.mean(h, axis=(0, 1, 2), keepdims=True)
        var = jnp.mean((h - mean) ** 2, axis=(0, 1, 2), keepdims=True)
        y = (h - mean) * lax.rsqrt(var + EPS) * g.reshape(1, 1, 1, -1) + b.reshape(1, 1, 1, -1)
        return jnp.maximum(y, NEG_SLOPE * y)

    def coord_conv_ref(h, w, b):
        n, hh, ww, _ = h.shape
        xx = jnp.broadcast_to(jnp.linspace(-1.0, 1.0, hh)[:, None], (hh, ww))
        yy = jnp.broadcast_to(jnp.linspace(-1.0, 1.0, ww)[None, :], (hh, ww))
        coords = jnp.broadcast_to(jnp.stack([xx, yy], -1)[None], (n, hh, ww, 2)).astype(h.dtype)
        hc = jnp.concatenate([h, coords], axis=-1)
        w4 = w.reshape(3, 3, w.shape[1], w.shape[2])
        out = lax.conv_general_dilated(hc, w4, (1, 1), "SAME",
                                       dimension_numbers=("NHWC", "HWIO", "NHWC"))
        return out + b.reshape(1, 1, 1, -1)

    h = bn_act_ref(x, p["bn1_gamma"], p["bn1_beta"])
    h = coord_conv_ref(h, p["w1"], p["b1"])
    h = bn_act_ref(h, p["bn2_gamma"], p["bn2_beta"])
    h = coord_conv_ref(h, p["w2"], p["b2"])
    return jnp.transpose(h + x, (0, 3, 1, 2))


# --------------------------------- main ---------------------------------------

if __name__ == "__main__":
    key = jax.random.PRNGKey(0)
    kx, kp = jax.random.split(key)
    N, C, H, W = 2, 4, 16, 16                      # input_nc = hidden_nc = output_nc = 4
    x = jax.random.normal(kx, (N, C, H, W), jnp.float32)
    params = init_params(kp, input_nc=C)

    out = jax.jit(res_block_forward)(x, params)
    out = jax.block_until_ready(out)

    assert out.shape == (N, C, H, W)
    assert bool(jnp.all(jnp.isfinite(out)))

    ref = res_block_reference(x, params)
    max_err = float(jnp.max(jnp.abs(out - ref)))
    assert max_err < 2e-2, f"max abs err too large: {max_err}"

    print("KERNEL_OK")
</pallas_src>

<mosaic_0001>
module attributes {stable_mosaic.version = 11 : i64} {
  func.func @_fused_kernel(%arg0: i32, %arg1: memref<1x4x256xf32, #tpu.memory_space<vmem>>, %arg2: memref<4x1xf32, #tpu.memory_space<vmem>>, %arg3: memref<4x1xf32, #tpu.memory_space<vmem>>, %arg4: memref<4x36xf32, #tpu.memory_space<vmem>>, %arg5: memref<4x256xf32, #tpu.memory_space<vmem>>, %arg6: memref<1x4x256xf32, #tpu.memory_space<vmem>>, %arg7: memref<1x4x2xf32, #tpu.memory_space<vmem>>) attributes {dimension_semantics = [#tpu.dimension_semantics<parallel>], iteration_bounds = array<i64: 2>, scalar_prefetch = 0 : i64, scratch_operands = 0 : i64, tpu.core_type = #tpu.core_type<tc>, window_params = [{transform_indices = @transform_0, window_bounds = array<i64: 1, 4, 256>}, {pipeline_mode = #tpu.pipeline_mode<synchronous>, transform_indices = @transform_1, window_bounds = array<i64: 4, 1>}, {pipeline_mode = #tpu.pipeline_mode<synchronous>, transform_indices = @transform_2, window_bounds = array<i64: 4, 1>}, {pipeline_mode = #tpu.pipeline_mode<synchronous>, transform_indices = @transform_3, window_bounds = array<i64: 4, 36>}, {pipeline_mode = #tpu.pipeline_mode<synchronous>, transform_indices = @transform_4, window_bounds = array<i64: 4, 256>}, {transform_indices = @transform_5, window_bounds = array<i64: 1, 4, 256>}, {transform_indices = @transform_6, window_bounds = array<i64: 1, 4, 2>}]} {
    %c0 = arith.constant 0 : index
    %c0_0 = arith.constant 0 : index
    %c0_1 = arith.constant 0 : index
    %0 = vector.load %arg1[%c0, %c0_0, %c0_1] : memref<1x4x256xf32, #tpu.memory_space<vmem>>, vector<1x4x256xf32>
    %1 = vector.shape_cast %0 : vector<1x4x256xf32> to vector<4x256xf32>
    %c0_2 = arith.constant 0 : index
    %c0_3 = arith.constant 0 : index
    %2 = vector.load %arg2[%c0_2, %c0_3] : memref<4x1xf32, #tpu.memory_space<vmem>>, vector<4x1xf32>
    %3 = vector.broadcast %2 : vector<4x1xf32> to vector<4x256xf32>
    %4 = arith.mulf %1, %3 : vector<4x256xf32>
    %c0_4 = arith.constant 0 : index
    %c0_5 = arith.constant 0 : index
    %5 = vector.load %arg3[%c0_4, %c0_5] : memref<4x1xf32, #tpu.memory_space<vmem>>, vector<4x1xf32>
    %6 = vector.broadcast %5 : vector<4x1xf32> to vector<4x256xf32>
    %7 = arith.addf %4, %6 : vector<4x256xf32>
    %cst = arith.constant 1.000000e-01 : f32
    %8 = vector.broadcast %cst : f32 to vector<4x256xf32>
    %9 = arith.mulf %8, %7 : vector<4x256xf32>
    %10 = arith.maximumf %7, %9 : vector<4x256xf32>
    %cst_6 = arith.constant 0.000000e+00 : f32
    %11 = vector.broadcast %cst_6 : f32 to vector<4x17xf32>
    %12 = tpu.concatenate %11, %10, %11 in 1 : vector<4x17xf32>, vector<4x256xf32>, vector<4x17xf32> -> vector<4x290xf32>
    %13 = tpu.iota {dimensions = array<i32: 1>} : vector<1x256xi32>
    %c16_i32 = arith.constant 16 : i32
    %c0_i32 = arith.constant 0 : i32
    %14 = arith.cmpi eq, %c16_i32, %c0_i32 : i32
    %c1_i32 = arith.constant 1 : i32
    %15 = arith.select %14, %c1_i32, %c16_i32 : i32
    %16 = vector.broadcast %15 : i32 to vector<1x256xi32>
    %17 = arith.remsi %13, %16 : vector<1x256xi32>
    %c0_i32_7 = arith.constant 0 : i32
    %18 = vector.broadcast %c0_i32_7 : i32 to vector<1x256xi32>
    %19 = arith.cmpi ne, %17, %18 : vector<1x256xi32>
    %c0_i32_8 = arith.constant 0 : i32
    %20 = vector.broadcast %c0_i32_8 : i32 to vector<1x256xi32>
    %21 = arith.cmpi slt, %17, %20 : vector<1x256xi32>
    %c0_i32_9 = arith.constant 0 : i32
    %22 = arith.cmpi slt, %15, %c0_i32_9 : i32
    %23 = vector.broadcast %22 : i1 to vector<1x256xi1>
    %24 = vector.broadcast %23 : vector<1x256xi1> to vector<1x256xi1>
    %25 = arith.xori %21, %24 : vector<1x256xi1>
    %26 = arith.andi %25, %19 : vector<1x256xi1>
    %27 = vector.broadcast %15 : i32 to vector<1x256xi32>
    %28 = arith.addi %17, %27 : vector<1x256xi32>
    %29 = arith.select %26, %28, %17 : vector<1x256xi1>, vector<1x256xi32>
    %30 = vector.extract_strided_slice %12 {offsets = [0, 0], sizes = [4, 256], strides = [1, 1]} : vector<4x290xf32> to vector<4x256xf32>
    %c1_i32_10 = arith.constant 1 : i32
    %31 = vector.broadcast %c1_i32_10 : i32 to vector<1x256xi32>
    %32 = arith.cmpi sge, %29, %31 : vector<1x256xi32>
    %cst_11 = arith.constant 0.000000e+00 : f32
    %33 = vector.shape_cast %32 : vector<1x256xi1> to vector<1x256xi1>
    %34 = vector.broadcast %33 : vector<1x256xi1> to vector<4x256xi1>
    %35 = vector.broadcast %cst_11 : f32 to vector<4x256xf32>
    %36 = arith.select %34, %30, %35 : vector<4x256xi1>, vector<4x256xf32>
    %37 = vector.extract_strided_slice %12 {offsets = [0, 1], sizes = [4, 256], strides = [1, 1]} : vector<4x290xf32> to vector<4x256xf32>
    %38 = vector.extract_strided_slice %12 {offsets = [0, 2], sizes = [4, 256], strides = [1, 1]} : vector<4x290xf32> to vector<4x256xf32>
    %c15_i32 = arith.constant 15 : i32
    %39 = vector.broadcast %c15_i32 : i32 to vector<1x256xi32>
    %40 = arith.cmpi slt, %29, %39 : vector<1x256xi32>
    %cst_12 = arith.constant 0.000000e+00 : f32
    %41 = vector.shape_cast %40 : vector<1x256xi1> to vector<1x256xi1>
    %42 = vector.broadcast %41 : vector<1x256xi1> to vector<4x256xi1>
    %43 = vector.broadcast %cst_12 : f32 to vector<4x256xf32>
    %44 = arith.select %42, %38, %43 : vector<4x256xi1>, vector<4x256xf32>
    %45 = vector.extract_strided_slice %12 {offsets = [0, 16], sizes = [4, 256], strides = [1, 1]} : vector<4x290xf32> to vector<4x256xf32>
    %c1_i32_13 = arith.constant 1 : i32
    %46 = vector.broadcast %c1_i32_13 : i32 to vector<1x256xi32>
    %47 = arith.cmpi sge, %29, %46 : vector<1x256xi32>
    %cst_14 = arith.constant 0.000000e+00 : f32
    %48 = vector.shape_cast %47 : vector<1x256xi1> to vector<1x256xi1>
    %49 = vector.broadcast %48 : vector<1x256xi1> to vector<4x256xi1>
    %50 = vector.broadcast %cst_14 : f32 to vector<4x256xf32>
    %51 = arith.select %49, %45, %50 : vector<4x256xi1>, vector<4x256xf32>
    %52 = vector.extract_strided_slice %12 {offsets = [0, 17], sizes = [4, 256], strides = [1, 1]} : vector<4x290xf32> to vector<4x256xf32>
    %53 = vector.extract_strided_slice %12 {offsets = [0, 18], sizes = [4, 256], strides = [1, 1]} : vector<4x290xf32> to vector<4x256xf32>
    %c15_i32_15 = arith.constant 15 : i32
    %54 = vector.broadcast %c15_i32_15 : i32 to vector<1x256xi32>
    %55 = arith.cmpi slt, %29, %54 : vector<1x256xi32>
    %cst_16 = arith.constant 0.000000e+00 : f32
    %56 = vector.shape_cast %55 : vector<1x256xi1> to vector<1x256xi1>
    %57 = vector.broadcast %56 : vector<1x256xi1> to vector<4x256xi1>
    %58 = vector.broadcast %cst_16 : f32 to vector<4x256xf32>
    %59 = arith.select %57, %53, %58 : vector<4x256xi1>, vector<4x256xf32>
    %60 = vector.extract_strided_slice %12 {offsets = [0, 32], sizes = [4, 256], strides = [1, 1]} : vector<4x290xf32> to vector<4x256xf32>
    %c1_i32_17 = arith.constant 1 : i32
    %61 = vector.broadcast %c1_i32_17 : i32 to vector<1x256xi32>
    %62 = arith.cmpi sge, %29, %61 : vector<1x256xi32>
    %cst_18 = arith.constant 0.000000e+00 : f32
    %63 = vector.shape_cast %62 : vector<1x256xi1> to vector<1x256xi1>
    %64 = vector.broadcast %63 : vector<1x256xi1> to vector<4x256xi1>
    %65 = vector.broadcast %cst_18 : f32 to vector<4x256xf32>
    %66 = arith.select %64, %60, %65 : vector<4x256xi1>, vector<4x256xf32>
    %67 = vector.extract_strided_slice %12 {offsets = [0, 33], sizes = [4, 256], strides = [1, 1]} : vector<4x290xf32> to vector<4x256xf32>
    %68 = vector.extract_strided_slice %12 {offsets = [0, 34], sizes = [4, 256], strides = [1, 1]} : vector<4x290xf32> to vector<4x256xf32>
    %c15_i32_19 = arith.constant 15 : i32
    %69 = vector.broadcast %c15_i32_19 : i32 to vector<1x256xi32>
    %70 = arith.cmpi slt, %29, %69 : vector<1x256xi32>
    %cst_20 = arith.constant 0.000000e+00 : f32
    %71 = vector.shape_cast %70 : vector<1x256xi1> to vector<1x256xi1>
    %72 = vector.broadcast %71 : vector<1x256xi1> to vector<4x256xi1>
    %73 = vector.broadcast %cst_20 : f32 to vector<4x256xf32>
    %74 = arith.select %72, %68, %73 : vector<4x256xi1>, vector<4x256xf32>
    %75 = tpu.concatenate %36, %37, %44, %51, %52, %59, %66, %67, %74 in 0 : vector<4x256xf32>, vector<4x256xf32>, vector<4x256xf32>, vector<4x256xf32>, vector<4x256xf32>, vector<4x256xf32>, vector<4x256xf32>, vector<4x256xf32>, vector<4x256xf32> -> vector<36x256xf32>
    %c0_21 = arith.constant 0 : index
    %c0_22 = arith.constant 0 : index
    %76 = vector.load %arg4[%c0_21, %c0_22] : memref<4x36xf32, #tpu.memory_space<vmem>>, vector<4x36xf32>
    %cst_23 = arith.constant dense<0.000000e+00> : vector<4x256xf32>
    %77 = tpu.matmul %76, %75, %cst_23 {dimension_numbers = #tpu.dot_dimension_numbers<[1], [0], [0], [1], [0, 0, 1, 1], [], []>} : vector<4x36xf32>, vector<36x256xf32>, vector<4x256xf32> -> vector<4x256xf32>
    %c0_24 = arith.constant 0 : index
    %c0_25 = arith.constant 0 : index
    %78 = vector.load %arg5[%c0_24, %c0_25] : memref<4x256xf32, #tpu.memory_space<vmem>>, vector<4x256xf32>
    %79 = arith.addf %77, %78 : vector<4x256xf32>
    %c0_26 = arith.constant 0 : index
    %c0_27 = arith.constant 0 : index
    %c0_28 = arith.constant 0 : index
    %80 = vector.load %arg6[%c0_26, %c0_27, %c0_28] : memref<1x4x256xf32, #tpu.memory_space<vmem>>, vector<1x4x256xf32>
    %81 = vector.shape_cast %80 : vector<1x4x256xf32> to vector<4x256xf32>
    %82 = vector.shape_cast %79 : vector<4x256xf32> to vector<1x4x256xf32>
    tpu.vector_store %arg6[%c0_26, %c0_27, %c0_28], %82 {strides = array<i32>} : memref<1x4x256xf32, #tpu.memory_space<vmem>>, vector<1x4x256xf32>,
    %cst_29 = arith.constant dense<0.000000e+00> : vector<4xf32>
    %83 = vector.multi_reduction <add>, %79, %cst_29 [1] : vector<4x256xf32> to vector<4xf32>
    %84 = vector.shape_cast %83 : vector<4xf32> to vector<4x1xf32>
    %85 = arith.mulf %79, %79 : vector<4x256xf32>
    %cst_30 = arith.constant dense<0.000000e+00> : vector<4xf32>
    %86 = vector.multi_reduction <add>, %85, %cst_30 [1] : vector<4x256xf32> to vector<4xf32>
    %87 = vector.shape_cast %86 : vector<4xf32> to vector<4x1xf32>
    %88 = tpu.concatenate %84, %87 in 1 : vector<4x1xf32>, vector<4x1xf32> -> vector<4x2xf32>
    %c0_31 = arith.constant 0 : index
    %c0_32 = arith.constant 0 : index
    %c0_33 = arith.constant 0 : index
    %89 = vector.load %arg7[%c0_31, %c0_32, %c0_33] : memref<1x4x2xf32, #tpu.memory_space<vmem>>, vector<1x4x2xf32>
    %90 = vector.shape_cast %89 : vector<1x4x2xf32> to vector<4x2xf32>
    %91 = vector.shape_cast %88 : vector<4x2xf32> to vector<1x4x2xf32>
    tpu.vector_store %arg7[%c0_31, %c0_32, %c0_33], %91 {strides = array<i32>} : memref<1x4x2xf32, #tpu.memory_space<vmem>>, vector<1x4x2xf32>,
    return
  }
  func.func @transform_0(%arg0: i32) -> (i32, i32, i32) {
    %c0_i32 = arith.constant 0 : i32
    %c0_i32_0 = arith.constant 0 : i32
    %c0_i32_1 = arith.constant 0 : i32
    return %arg0, %c0_i32, %c0_i32_0 : i32, i32, i32
  }
  func.func @transform_1(%arg0: i32) -> (i32, i32) {
    %c0_i32 = arith.constant 0 : i32
    %c0_i32_0 = arith.constant 0 : i32
    %c0_i32_1 = arith.constant 0 : i32
    return %c0_i32, %c0_i32_0 : i32, i32
  }
  func.func @transform_2(%arg0: i32) -> (i32, i32) {
    %c0_i32 = arith.constant 0 : i32
    %c0_i32_0 = arith.constant 0 : i32
    %c0_i32_1 = arith.constant 0 : i32
    return %c0_i32, %c0_i32_0 : i32, i32
  }
  func.func @transform_3(%arg0: i32) -> (i32, i32) {
    %c0_i32 = arith.constant 0 : i32
    %c0_i32_0 = arith.constant 0 : i32
    %c0_i32_1 = arith.constant 0 : i32
    return %c0_i32, %c0_i32_0 : i32, i32
  }
  func.func @transform_4(%arg0: i32) -> (i32, i32) {
    %c0_i32 = arith.constant 0 : i32
    %c0_i32_0 = arith.constant 0 : i32
    %c0_i32_1 = arith.constant 0 : i32
    return %c0_i32, %c0_i32_0 : i32, i32
  }
  func.func @transform_5(%arg0: i32) -> (i32, i32, i32) {
    %c0_i32 = arith.constant 0 : i32
    %c0_i32_0 = arith.constant 0 : i32
    %c0_i32_1 = arith.constant 0 : i32
    return %arg0, %c0_i32, %c0_i32_0 : i32, i32, i32
  }
  func.func @transform_6(%arg0: i32) -> (i32, i32, i32) {
    %c0_i32 = arith.constant 0 : i32
    %c0_i32_0 = arith.constant 0 : i32
    %c0_i32_1 = arith.constant 0 : i32
    return %arg0, %c0_i32, %c0_i32_0 : i32, i32, i32
  }
}

module attributes {stable_mosaic.version = 11 : i64} {
  func.func @_fused_kernel(%arg0: i32, %arg1: memref<1x4x256xf32, #tpu.memory_space<vmem>>, %arg2: memref<4x1xf32, #tpu.memory_space<vmem>>, %arg3: memref<4x1xf32, #tpu.memory_space<vmem>>, %arg4: memref<4x36xf32, #tpu.memory_space<vmem>>, %arg5: memref<4x256xf32, #tpu.memory_space<vmem>>, %arg6: memref<1x4x256xf32, #tpu.memory_space<vmem>>, %arg7: memref<1x4x256xf32, #tpu.memory_space<vmem>>) attributes {dimension_semantics = [#tpu.dimension_semantics<parallel>], iteration_bounds = array<i64: 2>, scalar_prefetch = 0 : i64, scratch_operands = 0 : i64, tpu.core_type = #tpu.core_type<tc>, window_params = [{transform_indices = @transform_0, window_bounds = array<i64: 1, 4, 256>}, {pipeline_mode = #tpu.pipeline_mode<synchronous>, transform_indices = @transform_1, window_bounds = array<i64: 4, 1>}, {pipeline_mode = #tpu.pipeline_mode<synchronous>, transform_indices = @transform_2, window_bounds = array<i64: 4, 1>}, {pipeline_mode = #tpu.pipeline_mode<synchronous>, transform_indices = @transform_3, window_bounds = array<i64: 4, 36>}, {pipeline_mode = #tpu.pipeline_mode<synchronous>, transform_indices = @transform_4, window_bounds = array<i64: 4, 256>}, {transform_indices = @transform_5, window_bounds = array<i64: 1, 4, 256>}, {transform_indices = @transform_6, window_bounds = array<i64: 1, 4, 256>}]} {
    %c0 = arith.constant 0 : index
    %c0_0 = arith.constant 0 : index
    %c0_1 = arith.constant 0 : index
    %0 = vector.load %arg1[%c0, %c0_0, %c0_1] : memref<1x4x256xf32, #tpu.memory_space<vmem>>, vector<1x4x256xf32>
    %1 = vector.shape_cast %0 : vector<1x4x256xf32> to vector<4x256xf32>
    %c0_2 = arith.constant 0 : index
    %c0_3 = arith.constant 0 : index
    %2 = vector.load %arg2[%c0_2, %c0_3] : memref<4x1xf32, #tpu.memory_space<vmem>>, vector<4x1xf32>
    %3 = vector.broadcast %2 : vector<4x1xf32> to vector<4x256xf32>
    %4 = arith.mulf %1, %3 : vector<4x256xf32>
    %c0_4 = arith.constant 0 : index
    %c0_5 = arith.constant 0 : index
    %5 = vector.load %arg3[%c0_4, %c0_5] : memref<4x1xf32, #tpu.memory_space<vmem>>, vector<4x1xf32>
    %6 = vector.broadcast %5 : vector<4x1xf32> to vector<4x256xf32>
    %7 = arith.addf %4, %6 : vector<4x256xf32>
    %cst = arith.constant 1.000000e-01 : f32
    %8 = vector.broadcast %cst : f32 to vector<4x256xf32>
    %9 = arith.mulf %8, %7 : vector<4x256xf32>
    %10 = arith.maximumf %7, %9 : vector<4x256xf32>
    %cst_6 = arith.constant 0.000000e+00 : f32
    %11 = vector.broadcast %cst_6 : f32 to vector<4x17xf32>
    %12 = tpu.concatenate %11, %10, %11 in 1 : vector<4x17xf32>, vector<4x256xf32>, vector<4x17xf32> -> vector<4x290xf32>
    %13 = tpu.iota {dimensions = array<i32: 1>} : vector<1x256xi32>
    %c16_i32 = arith.constant 16 : i32
    %c0_i32 = arith.constant 0 : i32
    %14 = arith.cmpi eq, %c16_i32, %c0_i32 : i32
    %c1_i32 = arith.constant 1 : i32
    %15 = arith.select %14, %c1_i32, %c16_i32 : i32
    %16 = vector.broadcast %15 : i32 to vector<1x256xi32>
    %17 = arith.remsi %13, %16 : vector<1x256xi32>
    %c0_i32_7 = arith.constant 0 : i32
    %18 = vector.broadcast %c0_i32_7 : i32 to vector<1x256xi32>
    %19 = arith.cmpi ne, %17, %18 : vector<1x256xi32>
    %c0_i32_8 = arith.constant 0 : i32
    %20 = vector.broadcast %c0_i32_8 : i32 to vector<1x256xi32>
    %21 = arith.cmpi slt, %17, %20 : vector<1x256xi32>
    %c0_i32_9 = arith.constant 0 : i32
    %22 = arith.cmpi slt, %15, %c0_i32_9 : i32
    %23 = vector.broadcast %22 : i1 to vector<1x256xi1>
    %24 = vector.broadcast %23 : vector<1x256xi1> to vector<1x256xi1>
    %25 = arith.xori %21, %24 : vector<1x256xi1>
    %26 = arith.andi %25, %19 : vector<1x256xi1>
    %27 = vector.broadcast %15 : i32 to vector<1x256xi32>
    %28 = arith.addi %17, %27 : vector<1x256xi32>
    %29 = arith.select %26, %28, %17 : vector<1x256xi1>, vector<1x256xi32>
    %30 = vector.extract_strided_slice %12 {offsets = [0, 0], sizes = [4, 256], strides = [1, 1]} : vector<4x290xf32> to vector<4x256xf32>
    %c1_i32_10 = arith.constant 1 : i32
    %31 = vector.broadcast %c1_i32_10 : i32 to vector<1x256xi32>
    %32 = arith.cmpi sge, %29, %31 : vector<1x256xi32>
    %cst_11 = arith.constant 0.000000e+00 : f32
    %33 = vector.shape_cast %32 : vector<1x256xi1> to vector<1x256xi1>
    %34 = vector.broadcast %33 : vector<1x256xi1> to vector<4x256xi1>
    %35 = vector.broadcast %cst_11 : f32 to vector<4x256xf32>
    %36 = arith.select %34, %30, %35 : vector<4x256xi1>, vector<4x256xf32>
    %37 = vector.extract_strided_slice %12 {offsets = [0, 1], sizes = [4, 256], strides = [1, 1]} : vector<4x290xf32> to vector<4x256xf32>
    %38 = vector.extract_strided_slice %12 {offsets = [0, 2], sizes = [4, 256], strides = [1, 1]} : vector<4x290xf32> to vector<4x256xf32>
    %c15_i32 = arith.constant 15 : i32
    %39 = vector.broadcast %c15_i32 : i32 to vector<1x256xi32>
    %40 = arith.cmpi slt, %29, %39 : vector<1x256xi32>
    %cst_12 = arith.constant 0.000000e+00 : f32
    %41 = vector.shape_cast %40 : vector<1x256xi1> to vector<1x256xi1>
    %42 = vector.broadcast %41 : vector<1x256xi1> to vector<4x256xi1>
    %43 = vector.broadcast %cst_12 : f32 to vector<4x256xf32>
    %44 = arith.select %42, %38, %43 : vector<4x256xi1>, vector<4x256xf32>
    %45 = vector.extract_strided_slice %12 {offsets = [0, 16], sizes = [4, 256], strides = [1, 1]} : vector<4x290xf32> to vector<4x256xf32>
    %c1_i32_13 = arith.constant 1 : i32
    %46 = vector.broadcast %c1_i32_13 : i32 to vector<1x256xi32>
    %47 = arith.cmpi sge, %29, %46 : vector<1x256xi32>
    %cst_14 = arith.constant 0.000000e+00 : f32
    %48 = vector.shape_cast %47 : vector<1x256xi1> to vector<1x256xi1>
    %49 = vector.broadcast %48 : vector<1x256xi1> to vector<4x256xi1>
    %50 = vector.broadcast %cst_14 : f32 to vector<4x256xf32>
    %51 = arith.select %49, %45, %50 : vector<4x256xi1>, vector<4x256xf32>
    %52 = vector.extract_strided_slice %12 {offsets = [0, 17], sizes = [4, 256], strides = [1, 1]} : vector<4x290xf32> to vector<4x256xf32>
    %53 = vector.extract_strided_slice %12 {offsets = [0, 18], sizes = [4, 256], strides = [1, 1]} : vector<4x290xf32> to vector<4x256xf32>
    %c15_i32_15 = arith.constant 15 : i32
    %54 = vector.broadcast %c15_i32_15 : i32 to vector<1x256xi32>
    %55 = arith.cmpi slt, %29, %54 : vector<1x256xi32>
    %cst_16 = arith.constant 0.000000e+00 : f32
    %56 = vector.shape_cast %55 : vector<1x256xi1> to vector<1x256xi1>
    %57 = vector.broadcast %56 : vector<1x256xi1> to vector<4x256xi1>
    %58 = vector.broadcast %cst_16 : f32 to vector<4x256xf32>
    %59 = arith.select %57, %53, %58 : vector<4x256xi1>, vector<4x256xf32>
    %60 = vector.extract_strided_slice %12 {offsets = [0, 32], sizes = [4, 256], strides = [1, 1]} : vector<4x290xf32> to vector<4x256xf32>
    %c1_i32_17 = arith.constant 1 : i32
    %61 = vector.broadcast %c1_i32_17 : i32 to vector<1x256xi32>
    %62 = arith.cmpi sge, %29, %61 : vector<1x256xi32>
    %cst_18 = arith.constant 0.000000e+00 : f32
    %63 = vector.shape_cast %62 : vector<1x256xi1> to vector<1x256xi1>
    %64 = vector.broadcast %63 : vector<1x256xi1> to vector<4x256xi1>
    %65 = vector.broadcast %cst_18 : f32 to vector<4x256xf32>
    %66 = arith.select %64, %60, %65 : vector<4x256xi1>, vector<4x256xf32>
    %67 = vector.extract_strided_slice %12 {offsets = [0, 33], sizes = [4, 256], strides = [1, 1]} : vector<4x290xf32> to vector<4x256xf32>
    %68 = vector.extract_strided_slice %12 {offsets = [0, 34], sizes = [4, 256], strides = [1, 1]} : vector<4x290xf32> to vector<4x256xf32>
    %c15_i32_19 = arith.constant 15 : i32
    %69 = vector.broadcast %c15_i32_19 : i32 to vector<1x256xi32>
    %70 = arith.cmpi slt, %29, %69 : vector<1x256xi32>
    %cst_20 = arith.constant 0.000000e+00 : f32
    %71 = vector.shape_cast %70 : vector<1x256xi1> to vector<1x256xi1>
    %72 = vector.broadcast %71 : vector<1x256xi1> to vector<4x256xi1>
    %73 = vector.broadcast %cst_20 : f32 to vector<4x256xf32>
    %74 = arith.select %72, %68, %73 : vector<4x256xi1>, vector<4x256xf32>
    %75 = tpu.concatenate %36, %37, %44, %51, %52, %59, %66, %67, %74 in 0 : vector<4x256xf32>, vector<4x256xf32>, vector<4x256xf32>, vector<4x256xf32>, vector<4x256xf32>, vector<4x256xf32>, vector<4x256xf32>, vector<4x256xf32>, vector<4x256xf32> -> vector<36x256xf32>
    %c0_21 = arith.constant 0 : index
    %c0_22 = arith.constant 0 : index
    %76 = vector.load %arg4[%c0_21, %c0_22] : memref<4x36xf32, #tpu.memory_space<vmem>>, vector<4x36xf32>
    %cst_23 = arith.constant dense<0.000000e+00> : vector<4x256xf32>
    %77 = tpu.matmul %76, %75, %cst_23 {dimension_numbers = #tpu.dot_dimension_numbers<[1], [0], [0], [1], [0, 0, 1, 1], [], []>} : vector<4x36xf32>, vector<36x256xf32>, vector<4x256xf32> -> vector<4x256xf32>
    %c0_24 = arith.constant 0 : index
    %c0_25 = arith.constant 0 : index
    %78 = vector.load %arg5[%c0_24, %c0_25] : memref<4x256xf32, #tpu.memory_space<vmem>>, vector<4x256xf32>
    %79 = arith.addf %77, %78 : vector<4x256xf32>
    %c0_26 = arith.constant 0 : index
    %c0_27 = arith.constant 0 : index
    %c0_28 = arith.constant 0 : index
    %80 = vector.load %arg6[%c0_26, %c0_27, %c0_28] : memref<1x4x256xf32, #tpu.memory_space<vmem>>, vector<1x4x256xf32>
    %81 = vector.shape_cast %80 : vector<1x4x256xf32> to vector<4x256xf32>
    %82 = arith.addf %79, %81 : vector<4x256xf32>
    %c0_29 = arith.constant 0 : index
    %c0_30 = arith.constant 0 : index
    %c0_31 = arith.constant 0 : index
    %83 = vector.load %arg7[%c0_29, %c0_30, %c0_31] : memref<1x4x256xf32, #tpu.memory_space<vmem>>, vector<1x4x256xf32>
    %84 = vector.shape_cast %83 : vector<1x4x256xf32> to vector<4x256xf32>
    %85 = vector.shape_cast %82 : vector<4x256xf32> to vector<1x4x256xf32>
    tpu.vector_store %arg7[%c0_29, %c0_30, %c0_31], %85 {strides = array<i32>} : memref<1x4x256xf32, #tpu.memory_space<vmem>>, vector<1x4x256xf32>,
    return
  }
  func.func @transform_0(%arg0: i32) -> (i32, i32, i32) {
    %c0_i32 = arith.constant 0 : i32
    %c0_i32_0 = arith.constant 0 : i32
    %c0_i32_1 = arith.constant 0 : i32
    return %arg0, %c0_i32, %c0_i32_0 : i32, i32, i32
  }
  func.func @transform_1(%arg0: i32) -> (i32, i32) {
    %c0_i32 = arith.constant 0 : i32
    %c0_i32_0 = arith.constant 0 : i32
    %c0_i32_1 = arith.constant 0 : i32
    return %c0_i32, %c0_i32_0 : i32, i32
  }
  func.func @transform_2(%arg0: i32) -> (i32, i32) {
    %c0_i32 = arith.constant 0 : i32
    %c0_i32_0 = arith.constant 0 : i32
    %c0_i32_1 = arith.constant 0 : i32
    return %c0_i32, %c0_i32_0 : i32, i32
  }
  func.func @transform_3(%arg0: i32) -> (i32, i32) {
    %c0_i32 = arith.constant 0 : i32
    %c0_i32_0 = arith.constant 0 : i32
    %c0_i32_1 = arith.constant 0 : i32
    return %c0_i32, %c0_i32_0 : i32, i32
  }
  func.func @transform_4(%arg0: i32) -> (i32, i32) {
    %c0_i32 = arith.constant 0 : i32
    %c0_i32_0 = arith.constant 0 : i32
    %c0_i32_1 = arith.constant 0 : i32
    return %c0_i32, %c0_i32_0 : i32, i32
  }
  func.func @transform_5(%arg0: i32) -> (i32, i32, i32) {
    %c0_i32 = arith.constant 0 : i32
    %c0_i32_0 = arith.constant 0 : i32
    %c0_i32_1 = arith.constant 0 : i32
    return %arg0, %c0_i32, %c0_i32_0 : i32, i32, i32
  }
  func.func @transform_6(%arg0: i32) -> (i32, i32, i32) {
    %c0_i32 = arith.constant 0 : i32
    %c0_i32_0 = arith.constant 0 : i32
    %c0_i32_1 = arith.constant 0 : i32
    return %arg0, %c0_i32, %c0_i32_0 : i32, i32, i32
  }
}

</mosaic_0001>

<llo_original>
// kernel: res_block_forward.2
$region0: #{res_block_forward.2}
  #allocation0 [shape = 'u32[]', space=smem, size = 0x4, offset = 0x4, fixed_abs, tag = 'smem constant byte address 0x4 - core index']
  #allocation1 [shape = 'u32[144,128]{1,0:T(1,128)}', space=vmem, size = 0x12000, scoped, tag = 'internal scratch']
  %s0 = inlined_call_operand.vmem [shape: f32[2,4,256], index: 0, kind: input, shape index: {}]
  %s1 = inlined_call_operand.vmem [shape: f32[4,1], index: 1, kind: input, shape index: {}]
  %s2 = inlined_call_operand.vmem [shape: f32[4,1], index: 2, kind: input, shape index: {}]
  %s3 = inlined_call_operand.vmem [shape: f32[4,36], index: 3, kind: input, shape index: {}]
  %s4 = inlined_call_operand.vmem [shape: f32[4,256], index: 4, kind: input, shape index: {}]
  %s5 = inlined_call_operand.vmem [shape: f32[2,4,256], index: 5, kind: output, shape index: {0}]
  %s6 = inlined_call_operand.vmem [shape: f32[2,4,2], index: 6, kind: output, shape index: {1}]
  %7 = xla_tuple %s5, %s6
  %s8 = sld [smem:[#allocation0]]
  $region61: #{res_block_forward.2} parent=0
    _
  %s10 = ssub.s32 1, %s8
  %s11 = scalar_select 0, %s10, %s8
  loop: start=0, step=1, limit=4
  $region2: #{res_block_forward.2} parent=0 // loop_pre_header
    _
  $region3: #{res_block_forward.2} parent=0 // loop_header
    %s13 = sphi 0, %s17
    %p14 = scmp.ge.s32.totalorder %s13, 4
    %s23 = sphi 0, %s25
    %s26 = sphi 0, %s23
    %s27 = sphi 0, %s26
    %s43 = sphi 0, %s27
    %s47 = sphi 0, %s47
    %s49 = sphi 0, %s47
    %s50 = sphi 0, %s49
    %s64 = sphi 0, %s50
    %s68 = sphi 0, %s68
    %s70 = sphi 0, %s68
    %s71 = sphi 0, %s70
    %s85 = sphi 0, %s71
    %s89 = sphi 0, %s89
    %s91 = sphi 0, %s89
    %s92 = sphi 0, %s91
    %s106 = sphi 0, %s92
    %s110 = sphi 0, %s110
    %s112 = sphi 0, %s110
    %s113 = sphi 0, %s112
    %s127 = sphi 0, %s113
    %s133 = sphi 0, %s135
    %s136 = sphi 0, %s133
    %s137 = sphi 0, %s136
    %s153 = sphi 0, %s137
    %s159 = sphi 0, %s161
    %s162 = sphi 0, %s159
    %s163 = sphi 0, %s162
    %s179 = sphi 0, %s163
  $region4: #{res_block_forward.2} parent=0 // loop_header_branch
    %16 = sbr.rel (%p14) target = $region8
  $region5: #{res_block_forward.2} parent=0 // loop_body
    %s18 = ssub.s32 %s13, 1
    %s19 = ssub.s32 %s13, 2
    %s20 = sadd.s32 %s13, 1
    %s21 = ssub.s32 %s13, %s20
    %p22 = scmp.eq.s32.totalorder %s21, 0
    %s24 = sadd.s32 %s23, 1
    %s25 = scalar_select %p22, %s23, %s24
    %p28 = pneg %p22
    %p29 = scmp.eq.s32.totalorder %s13, 1
    %p30 = por %p28, %p29
    %p31 = scmp.ne.s32.totalorder %s23, %s26
    %p32 = scmp.eq.s32.totalorder %s13, 0
    %p33 = por %p31, %p32
    %p34 = scmp.ne.s32.totalorder %s23, %s26
    %p35 = scmp.eq.s32.totalorder %s18, 1
    %p36 = por %p34, %p35
    %p37 = scmp.ne.s32.totalorder %s26, %s27
    %p38 = scmp.eq.s32.totalorder %s18, 0
    %p39 = por %p37, %p38
    %p40 = scmp.ne.s32.totalorder %s26, %s27
    %p41 = scmp.eq.s32.totalorder %s19, 1
    %p42 = por %p40, %p41
    %p44 = scmp.ne.s32.totalorder %s27, %s43
    %p45 = scmp.eq.s32.totalorder %s19, 0
    %p46 = por %p44, %p45
    %s48 = sadd.s32 %s47, 1
    %p51 = scmp.eq.s32.totalorder %s13, 1
    %p52 = scmp.ne.s32.totalorder %s47, %s49
    %p53 = scmp.eq.s32.totalorder %s13, 0
    %p54 = por %p52, %p53
    %p55 = scmp.ne.s32.totalorder %s47, %s49
    %p56 = scmp.eq.s32.totalorder %s18, 1
    %p57 = por %p55, %p56
    %p58 = scmp.ne.s32.totalorder %s49, %s50
    %p59 = scmp.eq.s32.totalorder %s18, 0
    %p60 = por %p58, %p59
    %p61 = scmp.ne.s32.totalorder %s49, %s50
    %p62 = scmp.eq.s32.totalorder %s19, 1
    %p63 = por %p61, %p62
    %p65 = scmp.ne.s32.totalorder %s50, %s64
    %p66 = scmp.eq.s32.totalorder %s19, 0
    %p67 = por %p65, %p66
    %s69 = sadd.s32 %s68, 1
    %p72 = scmp.eq.s32.totalorder %s13, 1
    %p73 = scmp.ne.s32.totalorder %s68, %s70
    %p74 = scmp.eq.s32.totalorder %s13, 0
    %p75 = por %p73, %p74
    %p76 = scmp.ne.s32.totalorder %s68, %s70
    %p77 = scmp.eq.s32.totalorder %s18, 1
    %p78 = por %p76, %p77
    %p79 = scmp.ne.s32.totalorder %s70, %s71
    %p80 = scmp.eq.s32.totalorder %s18, 0
    %p81 = por %p79, %p80
    %p82 = scmp.ne.s32.totalorder %s70, %s71
    %p83 = scmp.eq.s32.totalorder %s19, 1
    %p84 = por %p82, %p83
    %p86 = scmp.ne.s32.totalorder %s71, %s85
    %p87 = scmp.eq.s32.totalorder %s19, 0
    %p88 = por %p86, %p87
    %s90 = sadd.s32 %s89, 1
    %p93 = scmp.eq.s32.totalorder %s13, 1
    %p94 = scmp.ne.s32.totalorder %s89, %s91
    %p95 = scmp.eq.s32.totalorder %s13, 0
    %p96 = por %p94, %p95
    %p97 = scmp.ne.s32.totalorder %s89, %s91
    %p98 = scmp.eq.s32.totalorder %s18, 1
    %p99 = por %p97, %p98
    %p100 = scmp.ne.s32.totalorder %s91, %s92
    %p101 = scmp.eq.s32.totalorder %s18, 0
    %p102 = por %p100, %p101
    %p103 = scmp.ne.s32.totalorder %s91, %s92
    %p104 = scmp.eq.s32.totalorder %s19, 1
    %p105 = por %p103, %p104
    %p107 = scmp.ne.s32.totalorder %s92, %s106
    %p108 = scmp.eq.s32.totalorder %s19, 0
    %p109 = por %p107, %p108
    %s111 = sadd.s32 %s110, 1
    %p114 = scmp.eq.s32.totalorder %s13, 1
    %p115 = scmp.ne.s32.totalorder %s110, %s112
    %p116 = scmp.eq.s32.totalorder %s13, 0
    %p117 = por %p115, %p116
    %p118 = scmp.ne.s32.totalorder %s110, %s112
    %p119 = scmp.eq.s32.totalorder %s18, 1
    %p120 = por %p118, %p119
    %p121 = scmp.ne.s32.totalorder %s112, %s113
    %p122 = scmp.eq.s32.totalorder %s18, 0
    %p123 = por %p121, %p122
    %p124 = scmp.ne.s32.totalorder %s112, %s113
    %p125 = scmp.eq.s32.totalorder %s19, 1
    %p126 = por %p124, %p125
    %p128 = scmp.ne.s32.totalorder %s113, %s127
    %p129 = scmp.eq.s32.totalorder %s19, 0
    %p130 = por %p128, %p129
    %s131 = ssub.s32 %s13, %s20
    %p132 = scmp.eq.s32.totalorder %s131, 0
    %s134 = sadd.s32 %s133, 1
    %s135 = scalar_select %p132, %s133, %s134
    %p138 = pneg %p132
    %p139 = scmp.eq.s32.totalorder %s13, 1
    %p140 = por %p138, %p139
    %p141 = scmp.ne.s32.totalorder %s133, %s136
    %p142 = scmp.eq.s32.totalorder %s13, 0
    %p143 = por %p141, %p142
    %p144 = scmp.ne.s32.totalorder %s133, %s136
    %p145 = scmp.eq.s32.totalorder %s18, 1
    %p146 = por %p144, %p145
    %p147 = scmp.ne.s32.totalorder %s136, %s137
    %p148 = scmp.eq.s32.totalorder %s18, 0
    %p149 = por %p147, %p148
    %p150 = scmp.ne.s32.totalorder %s136, %s137
    %p151 = scmp.eq.s32.totalorder %s19, 1
    %p152 = por %p150, %p151
    %p154 = scmp.ne.s32.totalorder %s137, %s153
    %p155 = scmp.eq.s32.totalorder %s19, 0
    %p156 = por %p154, %p155
    %s157 = ssub.s32 %s13, %s20
    %p158 = scmp.eq.s32.totalorder %s157, 0
    %s160 = sadd.s32 %s159, 1
    %s161 = scalar_select %p158, %s159, %s160
    %p164 = pneg %p158
    %p165 = scmp.eq.s32.totalorder %s13, 1
    %p166 = por %p164, %p165
    %p167 = scmp.ne.s32.totalorder %s159, %s162
    %p168 = scmp.eq.s32.totalorder %s13, 0
    %p169 = por %p167, %p168
    %p170 = scmp.ne.s32.totalorder %s159, %s162
    %p171 = scmp.eq.s32.totalorder %s18, 1
    %p172 = por %p170, %p171
    %p173 = scmp.ne.s32.totalorder %s162, %s163
    %p174 = scmp.eq.s32.totalorder %s18, 0
    %p175 = por %p173, %p174
    %p176 = scmp.ne.s32.totalorder %s162, %s163
    %p177 = scmp.eq.s32.totalorder %s19, 1
    %p178 = por %p176, %p177
    %p180 = scmp.ne.s32.totalorder %s163, %s179
    %p181 = scmp.eq.s32.totalorder %s19, 0
    %p182 = por %p180, %p181
    %p183 = scmp.le.s32.totalorder 1, %s13
    %p184 = scmp.lt.s32.totalorder %s13, 3
    %p185 = pnand %p183, %p184
    %p186 = pneg %p185
    // Predicated region
    $region9: #{res_block_forward.2} parent=5 // pred_check
      _
    $region10: #{res_block_forward.2} parent=5 // pred_check_branch
      %188 = sbr.rel (%p185) target = $region12
    $region11: #{res_block_forward.2} parent=5 // pred_region
      %s189 = ssub.s32 %s13, 1
      // Predicated region
      $region13: #{res_block_forward.2} parent=11 // pred_check
        %p190 = pneg %p60
      $region14: #{res_block_forward.2} parent=11 // pred_check_branch
        %192 = sbr.rel (%p190) target = $region16
      $region15: #{res_block_forward.2} parent=11 // pred_region
        _
      $region16: #{res_block_forward.2} parent=11 // pred_fallthru
        _
      // Predicated region
      $region17: #{res_block_forward.2} parent=11 // pred_check
        %p193 = pneg %p81
      $region18: #{res_block_forward.2} parent=11 // pred_check_branch
        %195 = sbr.rel (%p193) target = $region20
      $region19: #{res_block_forward.2} parent=11 // pred_region
        _
      $region20: #{res_block_forward.2} parent=11 // pred_fallthru
        _
      // Predicated region
      $region21: #{res_block_forward.2} parent=11 // pred_check
        %p196 = pneg %p102
      $region22: #{res_block_forward.2} parent=11 // pred_check_branch
        %198 = sbr.rel (%p196) target = $region24
      $region23: #{res_block_forward.2} parent=11 // pred_region
        _
      $region24: #{res_block_forward.2} parent=11 // pred_fallthru
        _
      // Predicated region
      $region25: #{res_block_forward.2} parent=11 // pred_check
        %p199 = pneg %p123
      $region26: #{res_block_forward.2} parent=11 // pred_check_branch
        %201 = sbr.rel (%p199) target = $region28
      $region27: #{res_block_forward.2} parent=11 // pred_region
        _
      $region28: #{res_block_forward.2} parent=11 // pred_fallthru
        _
    $region12: #{res_block_forward.2} parent=5 // pred_fallthru
      _
    %p202 = scmp.lt.s32.totalorder %s13, 2
    // Predicated region
    $region29: #{res_block_forward.2} parent=5 // pred_check
      %p203 = pneg %p202
    $region30: #{res_block_forward.2} parent=5 // pred_check_branch
      %205 = sbr.rel (%p203) target = $region32
    $region31: #{res_block_forward.2} parent=5 // pred_region
      // Predicated region
      $region33: #{res_block_forward.2} parent=31 // pred_check
        %p206 = pneg %p33
      $region34: #{res_block_forward.2} parent=31 // pred_check_branch
        %208 = sbr.rel (%p206) target = $region36
      $region35: #{res_block_forward.2} parent=31 // pred_region
        %p209 = scmp.lt.s32.totalorder %s13, 1
        %s210 = scalar_select %p209, %s13, 1
        %s211 = smul.addr %s210, 2
        %s212 = smul.addr %s211, 4
        %s213 = scalar_lea.vmem %s0, %s212
      $region36: #{res_block_forward.2} parent=31 // pred_fallthru
        _
    $region32: #{res_block_forward.2} parent=5 // pred_fallthru
      _
    %p214 = scmp.le.s32.totalorder 1, %s13
    %p215 = scmp.lt.s32.totalorder %s13, 3
    %p216 = pnand %p214, %p215
    %p217 = pneg %p216
    // Predicated region
    $region37: #{res_block_forward.2} parent=5 // pred_check
      _
    $region38: #{res_block_forward.2} parent=5 // pred_check_branch
      %219 = sbr.rel (%p216) target = $region40
    $region39: #{res_block_forward.2} parent=5 // pred_region
      %s220 = ssub.s32 %s13, 1
      %p221 = scmp.lt.s32.totalorder %s18, 1
      %s222 = scalar_select %p221, %s18, 1
      %s223 = smul.addr %s222, 2
      %s224 = smul.addr %s223, 4
      %s225 = scalar_lea.vmem %s0, %s224
      %p226 = pneg %p39
      %p227 = pneg %p36
      %p228 = pneg %p60
      %p229 = pneg %p57
      %p230 = pneg %p81
      %p231 = pneg %p78
      %p232 = pneg %p102
      %p233 = pneg %p99
      %p234 = pneg %p123
      %p235 = pneg %p120
      %p236 = pneg %p149
      %p237 = pneg %p146
      %p238 = scmp.lt.s32.totalorder %s18, 1
      %s239 = scalar_select %p238, %s18, 1
      %s240 = smul.addr %s239, 2
      %s241 = smul.addr %s240, 4
      %s242 = scalar_lea.vmem %s5, %s241
      %p243 = pneg %p175
      %p244 = pneg %p172
      %p245 = scmp.lt.s32.totalorder %s18, 1
      %s246 = scalar_select %p245, %s18, 1
      %s247 = smul.addr %s246, 4
      %s248 = scalar_lea.vmem %s6, %s247
      %p249 = scmp.lt.s32.totalorder %s18, 1
      %s250 = scalar_select %p249, %s18, 1
      %s251 = smul.addr %s250, 2
      %s252 = smul.addr %s251, 4
      %s253 = scalar_lea.vmem %s0, %s252
      %p254 = scmp.lt.s32.totalorder %s18, 1
      %s255 = scalar_select %p254, %s18, 1
      %s256 = smul.addr %s255, 2
      %s257 = smul.addr %s256, 4
      %s258 = scalar_lea.vmem %s5, %s257
      %p259 = scmp.lt.s32.totalorder %s18, 1
      %s260 = scalar_select %p259, %s18, 1
      %s261 = smul.addr %s260, 4
      %s262 = scalar_lea.vmem %s6, %s261
      %v263 = vld [vmem:[%s253] sm:$0xff]
      %v264 = vld [vmem:[%s1] sm:$0xf]
      %266 = vset.pattern.permute.xlu0 0
      %267 = vperm.xlu0 %266, %v264
      %v268 = vpop.permute.xlu0 %267
      %v270 = vunpack.c.l.s4 839922192
      %v271 = vunpack.c.0.s8 %v270
      %v272 = vlaneseq
      %v273 = vshrl.u32 %v272, 7
      %v274 = vsub.s32 %v271, %v273
      %v275 = vrot.slane %v268, %v274
      %v277 = vmul.f32 %v263, %v275
      %v278 = vld [vmem:[%s2] sm:$0xf]
      %280 = vset.pattern.permute.xlu0 0
      %281 = vperm.xlu0 %280, %v278
      %v282 = vpop.permute.xlu0 %281
      %v284 = vunpack.c.l.s4 839922192
      %v285 = vunpack.c.0.s8 %v284
      %v286 = vlaneseq
      %v287 = vshrl.u32 %v286, 7
      %v288 = vsub.s32 %v285, %v287
      %v289 = vrot.slane %v282, %v288
      %v291 = vadd.f32 %v277, %v289
      %v292 = vmul.f32 %v291, 0.1
      %v293 = vmax.f32 %v291, %v292
      %v295 = vcombine.high %v293, %v293
      %296 = vrot.lane.b32.xlu0 %v293, 17
      %v297 = vpop.permute.xlu0 %296
      %298 = vrot.lane.b32.xlu0 %v295, 17
      %v299 = vpop.permute.xlu0 %298
      %vm300 = vcmask 138240
      %v301 = vsel %vm300, %v297, %v299
      %v305 = vsel %vm300, 0.0, %v297
      %v306 = vsel %vm300, %v299, 0.0
      %v307 = vlaneseq
      %v308 = vand.u32 %v307, 127
      %v309 = vadd.s32 %v308, 128
      %vm310 = vcmp.lt.s32.totalorder %v308, 0
      %v311 = vsub.s32 0, %v308
      %v312 = vsel %vm310, %v311, %v308
      %v313 = vshrl.u32 %v312, 4
      %v314 = vand.u32 %v312, 15
      %v315 = vsub.s32 0, %v314
      %v316 = vsel %vm310, %v315, %v314
      %vm317 = vcmp.lt.s32.totalorder %v309, 0
      %v318 = vsub.s32 0, %v309
      %v319 = vsel %vm317, %v318, %v309
      %v320 = vshrl.u32 %v319, 4
      %v321 = vand.u32 %v319, 15
      %v322 = vsub.s32 0, %v321
      %v323 = vsel %vm317, %v322, %v321
      %vm324 = vcmp.ne.s32.totalorder %v316, 0
      %vm325 = vcmp.ne.s32.totalorder %v323, 0
      %vm326 = vcmp.lt.s32.totalorder %v316, 0
      %vm327 = vcmp.lt.s32.totalorder %v323, 0
      %vm328 = vmand %vm326, %vm324
      %vm329 = vmand %vm327, %vm325
      %v330 = vadd.s32 %v316, 16
      %v331 = vadd.s32 %v323, 16
      %v332 = vsel %vm328, %v330, %v316
      %v333 = vsel %vm329, %v331, %v323
      %vm334 = vcmp.ge.s32.totalorder %v332, 1
      %vm335 = vcmp.ge.s32.totalorder %v333, 1
      %v336 = vsel %vm334, 1, 0
      %v337 = vsel %vm335, 1, 0
      %vm338 = vcmp.eq.s32.totalorder %v336, 1
      %vm339 = vcmp.eq.s32.totalorder %v337, 1
      %v340 = vsel %vm338, %v305, 0.0
      %v341 = vsel %vm339, %v301, 0.0
      %vm342 = vcmp.lt.s32.totalorder %v332, 15
      %vm343 = vcmp.lt.s32.totalorder %v333, 15
      %v344 = vsel %vm342, 1, 0
      %v345 = vsel %vm343, 1, 0
      %vm346 = vcmp.eq.s32.totalorder %v344, 1
      %vm347 = vcmp.eq.s32.totalorder %v345, 1
      %350 = vrot.lane.b32.xlu0 %v305, 126
      %v351 = vpop.permute.xlu0 %350
      %352 = vrot.lane.b32.xlu0 %v301, 126
      %v353 = vpop.permute.xlu0 %352
      %354 = vrot.lane.b32.xlu0 %v306, 126
      %v355 = vpop.permute.xlu0 %354
      %vm356 = vcmask 1031168
      %v357 = vsel %vm356, %v351, %v353
      %v358 = vsel %vm356, %v353, %v355
      %v361 = vsel %vm346, %v357, 0.0
      %v362 = vsel %vm347, %v358, 0.0
      %363 = vrot.lane.b32.xlu0 %v305, 112
      %v364 = vpop.permute.xlu0 %363
      %365 = vrot.lane.b32.xlu0 %v301, 112
      %v366 = vpop.permute.xlu0 %365
      %367 = vrot.lane.b32.xlu0 %v306, 112
      %v368 = vpop.permute.xlu0 %367
      %vm369 = vcmask 916480
      %v370 = vsel %vm369, %v364, %v366
      %v371 = vsel %vm369, %v366, %v368
      %v374 = vsel %vm338, %v370, 0.0
      %v375 = vsel %vm339, %v371, 0.0
      %376 = vrot.lane.b32.xlu0 %v305, 110
      %v377 = vpop.permute.xlu0 %376
      %378 = vrot.lane.b32.xlu0 %v301, 110
      %v379 = vpop.permute.xlu0 %378
      %380 = vrot.lane.b32.xlu0 %v306, 110
      %v381 = vpop.permute.xlu0 %380
      %vm382 = vcmask 900096
      %v383 = vsel %vm382, %v377, %v379
      %v384 = vsel %vm382, %v379, %v381
      %v387 = vsel %vm346, %v383, 0.0
      %v388 = vsel %vm347, %v384, 0.0
      %389 = vrot.lane.b32.xlu0 %v305, 96
      %v390 = vpop.permute.xlu0 %389
      %391 = vrot.lane.b32.xlu0 %v301, 96
      %v392 = vpop.permute.xlu0 %391
      %393 = vrot.lane.b32.xlu0 %v306, 96
      %v394 = vpop.permute.xlu0 %393
      %vm395 = vcmask 785408
      %v396 = vsel %vm395, %v390, %v392
      %v397 = vsel %vm395, %v392, %v394
      %v400 = vsel %vm338, %v396, 0.0
      %v401 = vsel %vm339, %v397, 0.0
      %402 = vrot.lane.b32.xlu0 %v305, 94
      %v403 = vpop.permute.xlu0 %402
      %404 = vrot.lane.b32.xlu0 %v301, 94
      %v405 = vpop.permute.xlu0 %404
      %406 = vrot.lane.b32.xlu0 %v306, 94
      %v407 = vpop.permute.xlu0 %406
      %vm408 = vcmask 769024
      %v409 = vsel %vm408, %v403, %v405
      %v410 = vsel %vm408, %v405, %v407
      %v413 = vsel %vm346, %v409, 0.0
      %v414 = vsel %vm347, %v410, 0.0
      %v415 = vrot.slane %v305, 4
      %v416 = vrot.slane %v301, 4
      %v417 = vrot.slane %v306, 4
      %418 = vrot.lane.b32.xlu0 %v415, 127
      %v419 = vpop.permute.xlu0 %418
      %420 = vrot.lane.b32.xlu0 %v416, 127
      %v421 = vpop.permute.xlu0 %420
      %422 = vrot.lane.b32.xlu0 %v417, 127
      %v423 = vpop.permute.xlu0 %422
      %vm424 = vcmask 1039360
      %v425 = vsel %vm424, %v419, %v421
      %v426 = vsel %vm424, %v421, %v423
      %v431 = vrot.slane %v374, 4
      %v432 = vrot.slane %v375, 4
      %435 = vrot.lane.b32.xlu0 %v305, 111
      %v436 = vpop.permute.xlu0 %435
      %437 = vrot.lane.b32.xlu0 %v301, 111
      %v438 = vpop.permute.xlu0 %437
      %439 = vrot.lane.b32.xlu0 %v306, 111
      %v440 = vpop.permute.xlu0 %439
      %vm441 = vcmask 908288
      %v442 = vsel %vm441, %v436, %v438
      %v443 = vsel %vm441, %v438, %v440
      %v448 = vrot.slane %v387, 4
      %v449 = vrot.slane %v388, 4
      %452 = vrot.lane.b32.xlu0 %v415, 95
      %v453 = vpop.permute.xlu0 %452
      %454 = vrot.lane.b32.xlu0 %v416, 95
      %v455 = vpop.permute.xlu0 %454
      %456 = vrot.lane.b32.xlu0 %v417, 95
      %v457 = vpop.permute.xlu0 %456
      %vm458 = vcmask 777216
      %v459 = vsel %vm458, %v453, %v455
      %v460 = vsel %vm458, %v455, %v457
      %vm463 = vcmask 1043456
      %v464 = vsel %vm463, %v340, %v425
      %v465 = vsel %vm463, %v341, %v426
      %v466 = vsel %vm463, %v361, %v431
      %v467 = vsel %vm463, %v362, %v432
      %v468 = vsel %vm463, %v442, %v448
      %v469 = vsel %vm463, %v443, %v449
      %v470 = vsel %vm463, %v400, %v459
      %v471 = vsel %vm463, %v401, %v460
      %v472 = vld [vmem:[%s3] sm:$0xf]
      %v473 = vld [vmem:[%s4] sm:$0xff]
      %v475 = vcombine.high %v473, %v473
      %vm477 = vcmask 293888
      %v479 = vsel %vm477, %v472, 0
      %v482 = vsel %vm463, %v413, 0
      %v485 = vsel %vm463, %v414, 0
      %487 = vmatprep.subr.mxu0 %v465
      %488 = vmatpush1.msra.mxu0 %v464
      %489 = vmatprep.subr.mxu0 %v467
      %490 = vmatpush1.msra.mxu0 %v466
      %491 = vmatprep.subr.mxu0 %v469
      %492 = vmatpush1.msra.mxu0 %v468
      %493 = vmatprep.subr.mxu0 %v471
      %494 = vmatpush1.msra.mxu0 %v470
      %495 = vmatprep.subr.mxu0 %v485
      %496 = vmatpush1.msra.mxu0 %v482
      %497 = vmatprep.subr.mxu0 0.0
      %498 = vmatpush1.msra.mxu0 0.0
      %499 = vmatprep.subr.mxu0 0.0
      %500 = vmatpush1.msra.mxu0 0.0
      %501 = vmatprep.subr.mxu0 0.0
      %502 = vmatpush1.msra.mxu0 0.0
      %503 = vmatprep.subr.mxu0 0.0
      %504 = vmatpush1.msra.mxu0 0.0
      %505 = vmatprep.subr.mxu0 0.0
      %506 = vmatpush1.msra.mxu0 0.0
      %507 = vmatprep.subr.mxu0 0.0
      %508 = vmatpush1.msra.mxu0 0.0
      %509 = vmatprep.subr.mxu0 0.0
      %510 = vmatpush1.msra.mxu0 0.0
      %511 = vmatprep.subr.mxu0 0.0
      %512 = vmatpush1.msra.mxu0 0.0
      %513 = vmatprep.subr.mxu0 0.0
      %514 = vmatpush1.msra.mxu0 0.0
      %515 = vmatprep.subr.mxu0 0.0
      %516 = vmatpush1.msra.mxu0 0.0
      %517 = vmatprep.subr.mxu0 0.0
      %518 = vmatpush1.msra.mxu0 0.0
      %519 = vmatprep.subr.mxu0 0.0
      %520 = vmatpush1.msra.mxu0 0.0
      %521 = vmatprep.subr.mxu0 0.0
      %522 = vmatpush1.msra.mxu0 0.0
      %523 = vmatprep.subr.mxu0 0.0
      %524 = vmatpush1.msra.mxu0 0.0
      %525 = vmatprep.subr.mxu0 0.0
      %526 = vmatpush1.msra.mxu0 0.0
      %527 = vmatprep.subr.mxu0 0.0
      %528 = vmatpush1.msra.mxu0 0.0
      %529 = vmatprep.subr.mxu0 0.0
      %530 = vmatpush1.msra.mxu0 0.0
      %531 = vmatprep.subr.mxu0 0.0
      %532 = vmatpush1.msra.mxu0 0.0
      %533 = vmatprep.subr.mxu0 0.0
      %534 = vmatpush1.msra.mxu0 0.0
      %535 = vmatprep.subr.mxu0 0.0
      %536 = vmatpush1.msra.mxu0 0.0
      %537 = vmatprep.subr.mxu0 0.0
      %538 = vmatpush1.msra.mxu0 0.0
      %539 = vmatprep.subr.mxu0 0.0
      %540 = vmatpush1.msra.mxu0 0.0
      %541 = vmatprep.subr.mxu0 0.0
      %542 = vmatpush1.msra.mxu0 0.0
      %543 = vmatprep.subr.mxu0 0.0
      %544 = vmatpush1.msra.mxu0 0.0
      %545 = vmatprep.subr.mxu0 0.0
      %546 = vmatpush1.msra.mxu0 0.0
      %547 = vmatprep.subr.mxu0 0.0
      %548 = vmatpush1.msra.mxu0 0.0
      %549 = vmatprep.subr.mxu0 0.0
      %550 = vmatpush1.msra.mxu0 0.0
      %551 = vmatprep.mubr.f32.mxu0 0.0
      %552 = vmatmul.mubr.f32.gmra.mrb[0].mxu0 %v479
      %v553 = vpop.f32.mrb[0].mxu0
      %v554 = vadd.f32 %v473, %v553
      %v555 = vpop.f32.mrb[0].mxu0
      %v556 = vadd.f32 %v475, %v555
      %557 = vdwg.mxu0
      %v560 = vcombine.low %v554, %v556
      %562 = vst [vmem:[%s258] sm:$0xff] %v560
      %v563 = vsel %vm463, %v554, 0.0
      %v564 = vsel %vm463, %v556, 0.0
      %v565 = vadd.f32 %v563, %v564
      %566 = vadd.xlane.f32.xlu0 %v565
      %v567 = vpop.xlane.xlu0 %566
      %v568 = vmul.f32 %v554, %v554
      %v569 = vmul.f32 %v556, %v556
      %v570 = vsel %vm463, %v568, 0.0
      %v571 = vsel %vm463, %v569, 0.0
      %v572 = vadd.f32 %v570, %v571
      %573 = vadd.xlane.f32.xlu0 %v572
      %v574 = vpop.xlane.xlu0 %573
      %vm575 = vcmask 7168
      %v576 = vsel %vm575, %v567, %v574
      %vm577 = vcmask 11264
      %578 = vst.msk [vmem:[%s262] sm:$0xf] %vm577, %v576
      %p579 = scmp.lt.s32.totalorder %s18, 1
      %s580 = scalar_select %p579, %s18, 1
      %s581 = smul.addr %s580, 2
      %s582 = smul.addr %s581, 4
      %s583 = scalar_lea.vmem %s5, %s582
      %p584 = scmp.lt.s32.totalorder %s18, 1
      %s585 = scalar_select %p584, %s18, 1
      %s586 = smul.addr %s585, 4
      %s587 = scalar_lea.vmem %s6, %s586
      // Predicated region
      $region41: #{res_block_forward.2} parent=39 // pred_check
        %p588 = pneg %p146
      $region42: #{res_block_forward.2} parent=39 // pred_check_branch
        %590 = sbr.rel (%p588) target = $region44
      $region43: #{res_block_forward.2} parent=39 // pred_region
        _
      $region44: #{res_block_forward.2} parent=39 // pred_fallthru
        _
      // Predicated region
      $region45: #{res_block_forward.2} parent=39 // pred_check
        %p591 = pneg %p172
      $region46: #{res_block_forward.2} parent=39 // pred_check_branch
        %593 = sbr.rel (%p591) target = $region48
      $region47: #{res_block_forward.2} parent=39 // pred_region
        _
      $region48: #{res_block_forward.2} parent=39 // pred_fallthru
        _
    $region40: #{res_block_forward.2} parent=5 // pred_fallthru
      _
    %p594 = scmp.le.s32.totalorder 2, %s13
    // Predicated region
    $region49: #{res_block_forward.2} parent=5 // pred_check
      %p595 = pneg %p594
    $region50: #{res_block_forward.2} parent=5 // pred_check_branch
      %597 = sbr.rel (%p595) target = $region52
    $region51: #{res_block_forward.2} parent=5 // pred_region
      %s598 = ssub.s32 %s13, 2
      // Predicated region
      $region53: #{res_block_forward.2} parent=51 // pred_check
        %p599 = pneg %p152
      $region54: #{res_block_forward.2} parent=51 // pred_check_branch
        %601 = sbr.rel (%p599) target = $region56
      $region55: #{res_block_forward.2} parent=51 // pred_region
        %p602 = scmp.lt.s32.totalorder %s19, 1
        %s603 = scalar_select %p602, %s19, 1
        %s604 = smul.addr %s603, 2
        %s605 = smul.addr %s604, 4
        %s606 = scalar_lea.vmem %s5, %s605
      $region56: #{res_block_forward.2} parent=51 // pred_fallthru
        _
      // Predicated region
      $region57: #{res_block_forward.2} parent=51 // pred_check
        %p607 = pneg %p178
      $region58: #{res_block_forward.2} parent=51 // pred_check_branch
        %609 = sbr.rel (%p607) target = $region60
      $region59: #{res_block_forward.2} parent=51 // pred_region
        %p610 = scmp.lt.s32.totalorder %s19, 1
        %s611 = scalar_select %p610, %s19, 1
        %s612 = smul.addr %s611, 4
        %s613 = scalar_lea.vmem %s6, %s612
      $region60: #{res_block_forward.2} parent=51 // pred_fallthru
        _
    $region52: #{res_block_forward.2} parent=5 // pred_fallthru
      _
  $region6: #{res_block_forward.2} parent=0 // loop_footer
    %s17 = sadd.s32 1, %s13
  $region7: #{res_block_forward.2} parent=0 // loop_footer_branch
    %12 = sbr.rel target = $region3
  $region8: #{res_block_forward.2} parent=0 // loop_exit
    _

// kernel: res_block_forward.3
$region0: #{res_block_forward.3}
  #allocation0 [shape = 'u32[]', space=smem, size = 0x4, offset = 0x4, fixed_abs, tag = 'smem constant byte address 0x4 - core index']
  #allocation1 [shape = 'u32[144,128]{1,0:T(1,128)}', space=vmem, size = 0x12000, scoped, tag = 'internal scratch']
  %s0 = inlined_call_operand.vmem [shape: f32[2,4,256], index: 0, kind: input, shape index: {}]
  %s1 = inlined_call_operand.vmem [shape: f32[4,1], index: 1, kind: input, shape index: {}]
  %s2 = inlined_call_operand.vmem [shape: f32[4,1], index: 2, kind: input, shape index: {}]
  %s3 = inlined_call_operand.vmem [shape: f32[4,36], index: 3, kind: input, shape index: {}]
  %s4 = inlined_call_operand.vmem [shape: f32[4,256], index: 4, kind: input, shape index: {}]
  %s5 = inlined_call_operand.vmem [shape: f32[2,4,256], index: 5, kind: input, shape index: {}]
  %s6 = inlined_call_operand.vmem [shape: f32[2,4,256], index: 6, kind: output, shape index: {}]
  %s7 = sld [smem:[#allocation0]]
  $region57: #{res_block_forward.3} parent=0
    _
  %s9 = ssub.s32 1, %s7
  %s10 = scalar_select 0, %s9, %s7
  loop: start=0, step=1, limit=4
  $region2: #{res_block_forward.3} parent=0 // loop_pre_header
    _
  $region3: #{res_block_forward.3} parent=0 // loop_header
    %s12 = sphi 0, %s16
    %p13 = scmp.ge.s32.totalorder %s12, 4
    %s22 = sphi 0, %s24
    %s25 = sphi 0, %s22
    %s26 = sphi 0, %s25
    %s42 = sphi 0, %s26
    %s46 = sphi 0, %s46
    %s48 = sphi 0, %s46
    %s49 = sphi 0, %s48
    %s63 = sphi 0, %s49
    %s67 = sphi 0, %s67
    %s69 = sphi 0, %s67
    %s70 = sphi 0, %s69
    %s84 = sphi 0, %s70
    %s88 = sphi 0, %s88
    %s90 = sphi 0, %s88
    %s91 = sphi 0, %s90
    %s105 = sphi 0, %s91
    %s109 = sphi 0, %s109
    %s111 = sphi 0, %s109
    %s112 = sphi 0, %s111
    %s126 = sphi 0, %s112
    %s132 = sphi 0, %s134
    %s135 = sphi 0, %s132
    %s136 = sphi 0, %s135
    %s152 = sphi 0, %s136
    %s158 = sphi 0, %s160
    %s161 = sphi 0, %s158
    %s162 = sphi 0, %s161
    %s178 = sphi 0, %s162
  $region4: #{res_block_forward.3} parent=0 // loop_header_branch
    %15 = sbr.rel (%p13) target = $region8
  $region5: #{res_block_forward.3} parent=0 // loop_body
    %s17 = ssub.s32 %s12, 1
    %s18 = ssub.s32 %s12, 2
    %s19 = sadd.s32 %s12, 1
    %s20 = ssub.s32 %s12, %s19
    %p21 = scmp.eq.s32.totalorder %s20, 0
    %s23 = sadd.s32 %s22, 1
    %s24 = scalar_select %p21, %s22, %s23
    %p27 = pneg %p21
    %p28 = scmp.eq.s32.totalorder %s12, 1
    %p29 = por %p27, %p28
    %p30 = scmp.ne.s32.totalorder %s22, %s25
    %p31 = scmp.eq.s32.totalorder %s12, 0
    %p32 = por %p30, %p31
    %p33 = scmp.ne.s32.totalorder %s22, %s25
    %p34 = scmp.eq.s32.totalorder %s17, 1
    %p35 = por %p33, %p34
    %p36 = scmp.ne.s32.totalorder %s25, %s26
    %p37 = scmp.eq.s32.totalorder %s17, 0
    %p38 = por %p36, %p37
    %p39 = scmp.ne.s32.totalorder %s25, %s26
    %p40 = scmp.eq.s32.totalorder %s18, 1
    %p41 = por %p39, %p40
    %p43 = scmp.ne.s32.totalorder %s26, %s42
    %p44 = scmp.eq.s32.totalorder %s18, 0
    %p45 = por %p43, %p44
    %s47 = sadd.s32 %s46, 1
    %p50 = scmp.eq.s32.totalorder %s12, 1
    %p51 = scmp.ne.s32.totalorder %s46, %s48
    %p52 = scmp.eq.s32.totalorder %s12, 0
    %p53 = por %p51, %p52
    %p54 = scmp.ne.s32.totalorder %s46, %s48
    %p55 = scmp.eq.s32.totalorder %s17, 1
    %p56 = por %p54, %p55
    %p57 = scmp.ne.s32.totalorder %s48, %s49
    %p58 = scmp.eq.s32.totalorder %s17, 0
    %p59 = por %p57, %p58
    %p60 = scmp.ne.s32.totalorder %s48, %s49
    %p61 = scmp.eq.s32.totalorder %s18, 1
    %p62 = por %p60, %p61
    %p64 = scmp.ne.s32.totalorder %s49, %s63
    %p65 = scmp.eq.s32.totalorder %s18, 0
    %p66 = por %p64, %p65
    %s68 = sadd.s32 %s67, 1
    %p71 = scmp.eq.s32.totalorder %s12, 1
    %p72 = scmp.ne.s32.totalorder %s67, %s69
    %p73 = scmp.eq.s32.totalorder %s12, 0
    %p74 = por %p72, %p73
    %p75 = scmp.ne.s32.totalorder %s67, %s69
    %p76 = scmp.eq.s32.totalorder %s17, 1
    %p77 = por %p75, %p76
    %p78 = scmp.ne.s32.totalorder %s69, %s70
    %p79 = scmp.eq.s32.totalorder %s17, 0
    %p80 = por %p78, %p79
    %p81 = scmp.ne.s32.totalorder %s69, %s70
    %p82 = scmp.eq.s32.totalorder %s18, 1
    %p83 = por %p81, %p82
    %p85 = scmp.ne.s32.totalorder %s70, %s84
    %p86 = scmp.eq.s32.totalorder %s18, 0
    %p87 = por %p85, %p86
    %s89 = sadd.s32 %s88, 1
    %p92 = scmp.eq.s32.totalorder %s12, 1
    %p93 = scmp.ne.s32.totalorder %s88, %s90
    %p94 = scmp.eq.s32.totalorder %s12, 0
    %p95 = por %p93, %p94
    %p96 = scmp.ne.s32.totalorder %s88, %s90
    %p97 = scmp.eq.s32.totalorder %s17, 1
    %p98 = por %p96, %p97
    %p99 = scmp.ne.s32.totalorder %s90, %s91
    %p100 = scmp.eq.s32.totalorder %s17, 0
    %p101 = por %p99, %p100
    %p102 = scmp.ne.s32.totalorder %s90, %s91
    %p103 = scmp.eq.s32.totalorder %s18, 1
    %p104 = por %p102, %p103
    %p106 = scmp.ne.s32.totalorder %s91, %s105
    %p107 = scmp.eq.s32.totalorder %s18, 0
    %p108 = por %p106, %p107
    %s110 = sadd.s32 %s109, 1
    %p113 = scmp.eq.s32.totalorder %s12, 1
    %p114 = scmp.ne.s32.totalorder %s109, %s111
    %p115 = scmp.eq.s32.totalorder %s12, 0
    %p116 = por %p114, %p115
    %p117 = scmp.ne.s32.totalorder %s109, %s111
    %p118 = scmp.eq.s32.totalorder %s17, 1
    %p119 = por %p117, %p118
    %p120 = scmp.ne.s32.totalorder %s111, %s112
    %p121 = scmp.eq.s32.totalorder %s17, 0
    %p122 = por %p120, %p121
    %p123 = scmp.ne.s32.totalorder %s111, %s112
    %p124 = scmp.eq.s32.totalorder %s18, 1
    %p125 = por %p123, %p124
    %p127 = scmp.ne.s32.totalorder %s112, %s126
    %p128 = scmp.eq.s32.totalorder %s18, 0
    %p129 = por %p127, %p128
    %s130 = ssub.s32 %s12, %s19
    %p131 = scmp.eq.s32.totalorder %s130, 0
    %s133 = sadd.s32 %s132, 1
    %s134 = scalar_select %p131, %s132, %s133
    %p137 = pneg %p131
    %p138 = scmp.eq.s32.totalorder %s12, 1
    %p139 = por %p137, %p138
    %p140 = scmp.ne.s32.totalorder %s132, %s135
    %p141 = scmp.eq.s32.totalorder %s12, 0
    %p142 = por %p140, %p141
    %p143 = scmp.ne.s32.totalorder %s132, %s135
    %p144 = scmp.eq.s32.totalorder %s17, 1
    %p145 = por %p143, %p144
    %p146 = scmp.ne.s32.totalorder %s135, %s136
    %p147 = scmp.eq.s32.totalorder %s17, 0
    %p148 = por %p146, %p147
    %p149 = scmp.ne.s32.totalorder %s135, %s136
    %p150 = scmp.eq.s32.totalorder %s18, 1
    %p151 = por %p149, %p150
    %p153 = scmp.ne.s32.totalorder %s136, %s152
    %p154 = scmp.eq.s32.totalorder %s18, 0
    %p155 = por %p153, %p154
    %s156 = ssub.s32 %s12, %s19
    %p157 = scmp.eq.s32.totalorder %s156, 0
    %s159 = sadd.s32 %s158, 1
    %s160 = scalar_select %p157, %s158, %s159
    %p163 = pneg %p157
    %p164 = scmp.eq.s32.totalorder %s12, 1
    %p165 = por %p163, %p164
    %p166 = scmp.ne.s32.totalorder %s158, %s161
    %p167 = scmp.eq.s32.totalorder %s12, 0
    %p168 = por %p166, %p167
    %p169 = scmp.ne.s32.totalorder %s158, %s161
    %p170 = scmp.eq.s32.totalorder %s17, 1
    %p171 = por %p169, %p170
    %p172 = scmp.ne.s32.totalorder %s161, %s162
    %p173 = scmp.eq.s32.totalorder %s17, 0
    %p174 = por %p172, %p173
    %p175 = scmp.ne.s32.totalorder %s161, %s162
    %p176 = scmp.eq.s32.totalorder %s18, 1
    %p177 = por %p175, %p176
    %p179 = scmp.ne.s32.totalorder %s162, %s178
    %p180 = scmp.eq.s32.totalorder %s18, 0
    %p181 = por %p179, %p180
    %p182 = scmp.le.s32.totalorder 1, %s12
    %p183 = scmp.lt.s32.totalorder %s12, 3
    %p184 = pnand %p182, %p183
    %p185 = pneg %p184
    // Predicated region
    $region9: #{res_block_forward.3} parent=5 // pred_check
      _
    $region10: #{res_block_forward.3} parent=5 // pred_check_branch
      %187 = sbr.rel (%p184) target = $region12
    $region11: #{res_block_forward.3} parent=5 // pred_region
      %s188 = ssub.s32 %s12, 1
      // Predicated region
      $region13: #{res_block_forward.3} parent=11 // pred_check
        %p189 = pneg %p59
      $region14: #{res_block_forward.3} parent=11 // pred_check_branch
        %191 = sbr.rel (%p189) target = $region16
      $region15: #{res_block_forward.3} parent=11 // pred_region
        _
      $region16: #{res_block_forward.3} parent=11 // pred_fallthru
        _
      // Predicated region
      $region17: #{res_block_forward.3} parent=11 // pred_check
        %p192 = pneg %p80
      $region18: #{res_block_forward.3} parent=11 // pred_check_branch
        %194 = sbr.rel (%p192) target = $region20
      $region19: #{res_block_forward.3} parent=11 // pred_region
        _
      $region20: #{res_block_forward.3} parent=11 // pred_fallthru
        _
      // Predicated region
      $region21: #{res_block_forward.3} parent=11 // pred_check
        %p195 = pneg %p101
      $region22: #{res_block_forward.3} parent=11 // pred_check_branch
        %197 = sbr.rel (%p195) target = $region24
      $region23: #{res_block_forward.3} parent=11 // pred_region
        _
      $region24: #{res_block_forward.3} parent=11 // pred_fallthru
        _
      // Predicated region
      $region25: #{res_block_forward.3} parent=11 // pred_check
        %p198 = pneg %p122
      $region26: #{res_block_forward.3} parent=11 // pred_check_branch
        %200 = sbr.rel (%p198) target = $region28
      $region27: #{res_block_forward.3} parent=11 // pred_region
        _
      $region28: #{res_block_forward.3} parent=11 // pred_fallthru
        _
    $region12: #{res_block_forward.3} parent=5 // pred_fallthru
      _
    %p201 = scmp.lt.s32.totalorder %s12, 2
    // Predicated region
    $region29: #{res_block_forward.3} parent=5 // pred_check
      %p202 = pneg %p201
    $region30: #{res_block_forward.3} parent=5 // pred_check_branch
      %204 = sbr.rel (%p202) target = $region32
    $region31: #{res_block_forward.3} parent=5 // pred_region
      // Predicated region
      $region33: #{res_block_forward.3} parent=31 // pred_check
        %p205 = pneg %p32
      $region34: #{res_block_forward.3} parent=31 // pred_check_branch
        %207 = sbr.rel (%p205) target = $region36
      $region35: #{res_block_forward.3} parent=31 // pred_region
        %p208 = scmp.lt.s32.totalorder %s12, 1
        %s209 = scalar_select %p208, %s12, 1
        %s210 = smul.addr %s209, 2
        %s211 = smul.addr %s210, 4
        %s212 = scalar_lea.vmem %s0, %s211
      $region36: #{res_block_forward.3} parent=31 // pred_fallthru
        _
      // Predicated region
      $region37: #{res_block_forward.3} parent=31 // pred_check
        %p213 = pneg %p142
      $region38: #{res_block_forward.3} parent=31 // pred_check_branch
        %215 = sbr.rel (%p213) target = $region40
      $region39: #{res_block_forward.3} parent=31 // pred_region
        %p216 = scmp.lt.s32.totalorder %s12, 1
        %s217 = scalar_select %p216, %s12, 1
        %s218 = smul.addr %s217, 2
        %s219 = smul.addr %s218, 4
        %s220 = scalar_lea.vmem %s5, %s219
      $region40: #{res_block_forward.3} parent=31 // pred_fallthru
        _
    $region32: #{res_block_forward.3} parent=5 // pred_fallthru
      _
    %p221 = scmp.le.s32.totalorder 1, %s12
    %p222 = scmp.lt.s32.totalorder %s12, 3
    %p223 = pnand %p221, %p222
    %p224 = pneg %p223
    // Predicated region
    $region41: #{res_block_forward.3} parent=5 // pred_check
      _
    $region42: #{res_block_forward.3} parent=5 // pred_check_branch
      %226 = sbr.rel (%p223) target = $region44
    $region43: #{res_block_forward.3} parent=5 // pred_region
      %s227 = ssub.s32 %s12, 1
      %p228 = scmp.lt.s32.totalorder %s17, 1
      %s229 = scalar_select %p228, %s17, 1
      %s230 = smul.addr %s229, 2
      %s231 = smul.addr %s230, 4
      %s232 = scalar_lea.vmem %s0, %s231
      %p233 = pneg %p38
      %p234 = pneg %p35
      %p235 = pneg %p59
      %p236 = pneg %p56
      %p237 = pneg %p80
      %p238 = pneg %p77
      %p239 = pneg %p101
      %p240 = pneg %p98
      %p241 = pneg %p122
      %p242 = pneg %p119
      %p243 = scmp.lt.s32.totalorder %s17, 1
      %s244 = scalar_select %p243, %s17, 1
      %s245 = smul.addr %s244, 2
      %s246 = smul.addr %s245, 4
      %s247 = scalar_lea.vmem %s5, %s246
      %p248 = pneg %p148
      %p249 = pneg %p145
      %p250 = pneg %p174
      %p251 = pneg %p171
      %p252 = scmp.lt.s32.totalorder %s17, 1
      %s253 = scalar_select %p252, %s17, 1
      %s254 = smul.addr %s253, 2
      %s255 = smul.addr %s254, 4
      %s256 = scalar_lea.vmem %s6, %s255
      %p257 = scmp.lt.s32.totalorder %s17, 1
      %s258 = scalar_select %p257, %s17, 1
      %s259 = smul.addr %s258, 2
      %s260 = smul.addr %s259, 4
      %s261 = scalar_lea.vmem %s0, %s260
      %p262 = scmp.lt.s32.totalorder %s17, 1
      %s263 = scalar_select %p262, %s17, 1
      %s264 = smul.addr %s263, 2
      %s265 = smul.addr %s264, 4
      %s266 = scalar_lea.vmem %s5, %s265
      %p267 = scmp.lt.s32.totalorder %s17, 1
      %s268 = scalar_select %p267, %s17, 1
      %s269 = smul.addr %s268, 2
      %s270 = smul.addr %s269, 4
      %s271 = scalar_lea.vmem %s6, %s270
      %v272 = vld [vmem:[%s261] sm:$0xff]
      %v273 = vld [vmem:[%s1] sm:$0xf]
      %275 = vset.pattern.permute.xlu0 0
      %276 = vperm.xlu0 %275, %v273
      %v277 = vpop.permute.xlu0 %276
      %v279 = vunpack.c.l.s4 839922192
      %v280 = vunpack.c.0.s8 %v279
      %v281 = vlaneseq
      %v282 = vshrl.u32 %v281, 7
      %v283 = vsub.s32 %v280, %v282
      %v284 = vrot.slane %v277, %v283
      %v286 = vmul.f32 %v272, %v284
      %v287 = vld [vmem:[%s2] sm:$0xf]
      %289 = vset.pattern.permute.xlu0 0
      %290 = vperm.xlu0 %289, %v287
      %v291 = vpop.permute.xlu0 %290
      %v293 = vunpack.c.l.s4 839922192
      %v294 = vunpack.c.0.s8 %v293
      %v295 = vlaneseq
      %v296 = vshrl.u32 %v295, 7
      %v297 = vsub.s32 %v294, %v296
      %v298 = vrot.slane %v291, %v297
      %v300 = vadd.f32 %v286, %v298
      %v301 = vmul.f32 %v300, 0.1
      %v302 = vmax.f32 %v300, %v301
      %v304 = vcombine.high %v302, %v302
      %305 = vrot.lane.b32.xlu0 %v302, 17
      %v306 = vpop.permute.xlu0 %305
      %307 = vrot.lane.b32.xlu0 %v304, 17
      %v308 = vpop.permute.xlu0 %307
      %vm309 = vcmask 138240
      %v310 = vsel %vm309, %v306, %v308
      %v314 = vsel %vm309, 0.0, %v306
      %v315 = vsel %vm309, %v308, 0.0
      %v316 = vlaneseq
      %v317 = vand.u32 %v316, 127
      %v318 = vadd.s32 %v317, 128
      %vm319 = vcmp.lt.s32.totalorder %v317, 0
      %v320 = vsub.s32 0, %v317
      %v321 = vsel %vm319, %v320, %v317
      %v322 = vshrl.u32 %v321, 4
      %v323 = vand.u32 %v321, 15
      %v324 = vsub.s32 0, %v323
      %v325 = vsel %vm319, %v324, %v323
      %vm326 = vcmp.lt.s32.totalorder %v318, 0
      %v327 = vsub.s32 0, %v318
      %v328 = vsel %vm326, %v327, %v318
      %v329 = vshrl.u32 %v328, 4
      %v330 = vand.u32 %v328, 15
      %v331 = vsub.s32 0, %v330
      %v332 = vsel %vm326, %v331, %v330
      %vm333 = vcmp.ne.s32.totalorder %v325, 0
      %vm334 = vcmp.ne.s32.totalorder %v332, 0
      %vm335 = vcmp.lt.s32.totalorder %v325, 0
      %vm336 = vcmp.lt.s32.totalorder %v332, 0
      %vm337 = vmand %vm335, %vm333
      %vm338 = vmand %vm336, %vm334
      %v339 = vadd.s32 %v325, 16
      %v340 = vadd.s32 %v332, 16
      %v341 = vsel %vm337, %v339, %v325
      %v342 = vsel %vm338, %v340, %v332
      %vm343 = vcmp.ge.s32.totalorder %v341, 1
      %vm344 = vcmp.ge.s32.totalorder %v342, 1
      %v345 = vsel %vm343, 1, 0
      %v346 = vsel %vm344, 1, 0
      %vm347 = vcmp.eq.s32.totalorder %v345, 1
      %vm348 = vcmp.eq.s32.totalorder %v346, 1
      %v349 = vsel %vm347, %v314, 0.0
      %v350 = vsel %vm348, %v310, 0.0
      %vm351 = vcmp.lt.s32.totalorder %v341, 15
      %vm352 = vcmp.lt.s32.totalorder %v342, 15
      %v353 = vsel %vm351, 1, 0
      %v354 = vsel %vm352, 1, 0
      %vm355 = vcmp.eq.s32.totalorder %v353, 1
      %vm356 = vcmp.eq.s32.totalorder %v354, 1
      %359 = vrot.lane.b32.xlu0 %v314, 126
      %v360 = vpop.permute.xlu0 %359
      %361 = vrot.lane.b32.xlu0 %v310, 126
      %v362 = vpop.permute.xlu0 %361
      %363 = vrot.lane.b32.xlu0 %v315, 126
      %v364 = vpop.permute.xlu0 %363
      %vm365 = vcmask 1031168
      %v366 = vsel %vm365, %v360, %v362
      %v367 = vsel %vm365, %v362, %v364
      %v370 = vsel %vm355, %v366, 0.0
      %v371 = vsel %vm356, %v367, 0.0
      %372 = vrot.lane.b32.xlu0 %v314, 112
      %v373 = vpop.permute.xlu0 %372
      %374 = vrot.lane.b32.xlu0 %v310, 112
      %v375 = vpop.permute.xlu0 %374
      %376 = vrot.lane.b32.xlu0 %v315, 112
      %v377 = vpop.permute.xlu0 %376
      %vm378 = vcmask 916480
      %v379 = vsel %vm378, %v373, %v375
      %v380 = vsel %vm378, %v375, %v377
      %v383 = vsel %vm347, %v379, 0.0
      %v384 = vsel %vm348, %v380, 0.0
      %385 = vrot.lane.b32.xlu0 %v314, 110
      %v386 = vpop.permute.xlu0 %385
      %387 = vrot.lane.b32.xlu0 %v310, 110
      %v388 = vpop.permute.xlu0 %387
      %389 = vrot.lane.b32.xlu0 %v315, 110
      %v390 = vpop.permute.xlu0 %389
      %vm391 = vcmask 900096
      %v392 = vsel %vm391, %v386, %v388
      %v393 = vsel %vm391, %v388, %v390
      %v396 = vsel %vm355, %v392, 0.0
      %v397 = vsel %vm356, %v393, 0.0
      %398 = vrot.lane.b32.xlu0 %v314, 96
      %v399 = vpop.permute.xlu0 %398
      %400 = vrot.lane.b32.xlu0 %v310, 96
      %v401 = vpop.permute.xlu0 %400
      %402 = vrot.lane.b32.xlu0 %v315, 96
      %v403 = vpop.permute.xlu0 %402
      %vm404 = vcmask 785408
      %v405 = vsel %vm404, %v399, %v401
      %v406 = vsel %vm404, %v401, %v403
      %v409 = vsel %vm347, %v405, 0.0
      %v410 = vsel %vm348, %v406, 0.0
      %411 = vrot.lane.b32.xlu0 %v314, 94
      %v412 = vpop.permute.xlu0 %411
      %413 = vrot.lane.b32.xlu0 %v310, 94
      %v414 = vpop.permute.xlu0 %413
      %415 = vrot.lane.b32.xlu0 %v315, 94
      %v416 = vpop.permute.xlu0 %415
      %vm417 = vcmask 769024
      %v418 = vsel %vm417, %v412, %v414
      %v419 = vsel %vm417, %v414, %v416
      %v422 = vsel %vm355, %v418, 0.0
      %v423 = vsel %vm356, %v419, 0.0
      %v424 = vrot.slane %v314, 4
      %v425 = vrot.slane %v310, 4
      %v426 = vrot.slane %v315, 4
      %427 = vrot.lane.b32.xlu0 %v424, 127
      %v428 = vpop.permute.xlu0 %427
      %429 = vrot.lane.b32.xlu0 %v425, 127
      %v430 = vpop.permute.xlu0 %429
      %431 = vrot.lane.b32.xlu0 %v426, 127
      %v432 = vpop.permute.xlu0 %431
      %vm433 = vcmask 1039360
      %v434 = vsel %vm433, %v428, %v430
      %v435 = vsel %vm433, %v430, %v432
      %v440 = vrot.slane %v383, 4
      %v441 = vrot.slane %v384, 4
      %444 = vrot.lane.b32.xlu0 %v314, 111
      %v445 = vpop.permute.xlu0 %444
      %446 = vrot.lane.b32.xlu0 %v310, 111
      %v447 = vpop.permute.xlu0 %446
      %448 = vrot.lane.b32.xlu0 %v315, 111
      %v449 = vpop.permute.xlu0 %448
      %vm450 = vcmask 908288
      %v451 = vsel %vm450, %v445, %v447
      %v452 = vsel %vm450, %v447, %v449
      %v457 = vrot.slane %v396, 4
      %v458 = vrot.slane %v397, 4
      %461 = vrot.lane.b32.xlu0 %v424, 95
      %v462 = vpop.permute.xlu0 %461
      %463 = vrot.lane.b32.xlu0 %v425, 95
      %v464 = vpop.permute.xlu0 %463
      %465 = vrot.lane.b32.xlu0 %v426, 95
      %v466 = vpop.permute.xlu0 %465
      %vm467 = vcmask 777216
      %v468 = vsel %vm467, %v462, %v464
      %v469 = vsel %vm467, %v464, %v466
      %vm472 = vcmask 1043456
      %v473 = vsel %vm472, %v349, %v434
      %v474 = vsel %vm472, %v350, %v435
      %v475 = vsel %vm472, %v370, %v440
      %v476 = vsel %vm472, %v371, %v441
      %v477 = vsel %vm472, %v451, %v457
      %v478 = vsel %vm472, %v452, %v458
      %v479 = vsel %vm472, %v409, %v468
      %v480 = vsel %vm472, %v410, %v469
      %v481 = vld [vmem:[%s3] sm:$0xf]
      %v482 = vld [vmem:[%s4] sm:$0xff]
      %v484 = vcombine.high %v482, %v482
      %vm486 = vcmask 293888
      %v488 = vsel %vm486, %v481, 0
      %v491 = vsel %vm472, %v422, 0
      %v494 = vsel %vm472, %v423, 0
      %496 = vmatprep.subr.mxu0 %v474
      %497 = vmatpush1.msra.mxu0 %v473
      %498 = vmatprep.subr.mxu0 %v476
      %499 = vmatpush1.msra.mxu0 %v475
      %500 = vmatprep.subr.mxu0 %v478
      %501 = vmatpush1.msra.mxu0 %v477
      %502 = vmatprep.subr.mxu0 %v480
      %503 = vmatpush1.msra.mxu0 %v479
      %504 = vmatprep.subr.mxu0 %v494
      %505 = vmatpush1.msra.mxu0 %v491
      %506 = vmatprep.subr.mxu0 0.0
      %507 = vmatpush1.msra.mxu0 0.0
      %508 = vmatprep.subr.mxu0 0.0
      %509 = vmatpush1.msra.mxu0 0.0
      %510 = vmatprep.subr.mxu0 0.0
      %511 = vmatpush1.msra.mxu0 0.0
      %512 = vmatprep.subr.mxu0 0.0
      %513 = vmatpush1.msra.mxu0 0.0
      %514 = vmatprep.subr.mxu0 0.0
      %515 = vmatpush1.msra.mxu0 0.0
      %516 = vmatprep.subr.mxu0 0.0
      %517 = vmatpush1.msra.mxu0 0.0
      %518 = vmatprep.subr.mxu0 0.0
      %519 = vmatpush1.msra.mxu0 0.0
      %520 = vmatprep.subr.mxu0 0.0
      %521 = vmatpush1.msra.mxu0 0.0
      %522 = vmatprep.subr.mxu0 0.0
      %523 = vmatpush1.msra.mxu0 0.0
      %524 = vmatprep.subr.mxu0 0.0
      %525 = vmatpush1.msra.mxu0 0.0
      %526 = vmatprep.subr.mxu0 0.0
      %527 = vmatpush1.msra.mxu0 0.0
      %528 = vmatprep.subr.mxu0 0.0
      %529 = vmatpush1.msra.mxu0 0.0
      %530 = vmatprep.subr.mxu0 0.0
      %531 = vmatpush1.msra.mxu0 0.0
      %532 = vmatprep.subr.mxu0 0.0
      %533 = vmatpush1.msra.mxu0 0.0
      %534 = vmatprep.subr.mxu0 0.0
      %535 = vmatpush1.msra.mxu0 0.0
      %536 = vmatprep.subr.mxu0 0.0
      %537 = vmatpush1.msra.mxu0 0.0
      %538 = vmatprep.subr.mxu0 0.0
      %539 = vmatpush1.msra.mxu0 0.0
      %540 = vmatprep.subr.mxu0 0.0
      %541 = vmatpush1.msra.mxu0 0.0
      %542 = vmatprep.subr.mxu0 0.0
      %543 = vmatpush1.msra.mxu0 0.0
      %544 = vmatprep.subr.mxu0 0.0
      %545 = vmatpush1.msra.mxu0 0.0
      %546 = vmatprep.subr.mxu0 0.0
      %547 = vmatpush1.msra.mxu0 0.0
      %548 = vmatprep.subr.mxu0 0.0
      %549 = vmatpush1.msra.mxu0 0.0
      %550 = vmatprep.subr.mxu0 0.0
      %551 = vmatpush1.msra.mxu0 0.0
      %552 = vmatprep.subr.mxu0 0.0
      %553 = vmatpush1.msra.mxu0 0.0
      %554 = vmatprep.subr.mxu0 0.0
      %555 = vmatpush1.msra.mxu0 0.0
      %556 = vmatprep.subr.mxu0 0.0
      %557 = vmatpush1.msra.mxu0 0.0
      %558 = vmatprep.subr.mxu0 0.0
      %559 = vmatpush1.msra.mxu0 0.0
      %560 = vmatprep.mubr.f32.mxu0 0.0
      %561 = vmatmul.mubr.f32.gmra.mrb[0].mxu0 %v488
      %v562 = vpop.f32.mrb[0].mxu0
      %v563 = vadd.f32 %v482, %v562
      %v564 = vpop.f32.mrb[0].mxu0
      %v565 = vadd.f32 %v484, %v564
      %566 = vdwg.mxu0
      %v567 = vld [vmem:[%s266] sm:$0xff]
      %v569 = vcombine.high %v567, %v567
      %v571 = vadd.f32 %v563, %v567
      %v572 = vadd.f32 %v565, %v569
      %v575 = vcombine.low %v571, %v572
      %577 = vst [vmem:[%s271] sm:$0xff] %v575
      %p578 = scmp.lt.s32.totalorder %s17, 1
      %s579 = scalar_select %p578, %s17, 1
      %s580 = smul.addr %s579, 2
      %s581 = smul.addr %s580, 4
      %s582 = scalar_lea.vmem %s6, %s581
      // Predicated region
      $region45: #{res_block_forward.3} parent=43 // pred_check
        %p583 = pneg %p171
      $region46: #{res_block_forward.3} parent=43 // pred_check_branch
        %585 = sbr.rel (%p583) target = $region48
      $region47: #{res_block_forward.3} parent=43 // pred_region
        _
      $region48: #{res_block_forward.3} parent=43 // pred_fallthru
        _
    $region44: #{res_block_forward.3} parent=5 // pred_fallthru
      _
    %p586 = scmp.le.s32.totalorder 2, %s12
    // Predicated region
    $region49: #{res_block_forward.3} parent=5 // pred_check
      %p587 = pneg %p586
    $region50: #{res_block_forward.3} parent=5 // pred_check_branch
      %589 = sbr.rel (%p587) target = $region52
    $region51: #{res_block_forward.3} parent=5 // pred_region
      %s590 = ssub.s32 %s12, 2
      // Predicated region
      $region53: #{res_block_forward.3} parent=51 // pred_check
        %p591 = pneg %p177
      $region54: #{res_block_forward.3} parent=51 // pred_check_branch
        %593 = sbr.rel (%p591) target = $region56
      $region55: #{res_block_forward.3} parent=51 // pred_region
        %p594 = scmp.lt.s32.totalorder %s18, 1
        %s595 = scalar_select %p594, %s18, 1
        %s596 = smul.addr %s595, 2
        %s597 = smul.addr %s596, 4
        %s598 = scalar_lea.vmem %s6, %s597
      $region56: #{res_block_forward.3} parent=51 // pred_fallthru
        _
    $region52: #{res_block_forward.3} parent=5 // pred_fallthru
      _
  $region6: #{res_block_forward.3} parent=0 // loop_footer
    %s16 = sadd.s32 1, %s12
  $region7: #{res_block_forward.3} parent=0 // loop_footer_branch
    %11 = sbr.rel target = $region3
  $region8: #{res_block_forward.3} parent=0 // loop_exit
    _

</llo_original>
